<compile_context>
chip_gen: v7x
topology: tpu7x:2x2x1
jax: 0.10.0
libtpu: 0.0.40
codegen_flags: <defaults>
</compile_context>

<pallas_src>
import functools

import jax
import jax.numpy as jnp
import numpy as np
from jax import lax
from jax.experimental import pallas as pl
from jax.experimental.pallas import tpu as pltpu

_CORNERS = tuple((a, b, c) for a in (0, 1) for b in (0, 1) for c in (0, 1))


def _identity_grid(D, H, W):
    d, h, w = jnp.meshgrid(jnp.arange(D), jnp.arange(H), jnp.arange(W), indexing="ij")
    return jnp.stack([d, h, w]).astype(jnp.float32)  # [3, D, H, W]


def _vecint_kernel(flow_ref, grid_ref, out_ref, flow_a, rstack,
                   *, D, H, W, step, tn, tm):
    """One batch element: flow_ref [1,3,N], grid_ref [3,N], out_ref [1,3,N].

    flow_a (3, N)  f32 : current integrated flow (updated in place, tile by tile)
    rstack (24, N) f32 : 8 corner-shifted copies of flow_a, frozen at step start
    """
    N = D * H * W
    HW = H * W
    n_tiles = N // tn
    n_rblocks = N // tm

    # integration starting point: flow / 2**step (scaled in-kernel)
    flow_a[...] = flow_ref[0] * jnp.float32(1.0 / (2 ** step))

    @pl.loop(0, step)
    def _step(_):
        # ---- build the 8 corner-shifted flow copies ONCE per step -------------------
        # roll(flow, -off, axis=1)[m] == flow[(m + off) mod N], therefore
        #   (roll(flow, -off) @ onehot(flat0))[:, n] == flow[:, (flat0[n] + off) mod N]
        cur_full = flow_a[...]                                   # frozen source, (3, N)
        for k, (a, b, c) in enumerate(_CORNERS):
            off = a * HW + b * W + c
            shift = (-off) % N
            rolled = cur_full if shift == 0 else pltpu.roll(cur_full, shift=shift, axis=1)
            for ch in range(3):                                  # aligned single-row stores
                rstack[pl.ds(3 * k + ch, 1), :] = rolled[ch:ch + 1, :]

        # ---- warp tile-by-tile; new flow written back into flow_a in place ----------
        @pl.loop(0, n_tiles)
        def _tile(j):
            col0 = pl.multiple_of(j * tn, tn)
            cur = flow_a[:, pl.ds(col0, tn)]                     # (3, tn) old flow
            p = cur + grid_ref[:, pl.ds(col0, tn)]               # sample coords (voxels)
            p0 = jnp.floor(p)
            frac = p - p0
            p0i = p0.astype(jnp.int32)

            d0i, h0i, w0i = p0i[0:1], p0i[1:2], p0i[2:3]
            fd, fh, fw = frac[0:1], frac[1:2], frac[2:3]

            # per-axis masked corner weights (zero padding outside the volume)
            md = (jnp.where((d0i >= 0) & (d0i < D), 1.0 - fd, 0.0),
                  jnp.where((d0i >= -1) & (d0i < D - 1), fd, 0.0))
            mh = (jnp.where((h0i >= 0) & (h0i < H), 1.0 - fh, 0.0),
                  jnp.where((h0i >= -1) & (h0i < H - 1), fh, 0.0))
            mw = (jnp.where((w0i >= 0) & (w0i < W), 1.0 - fw, 0.0),
                  jnp.where((w0i >= -1) & (w0i < W - 1), fw, 0.0))

            # base flat index for corner (0,0,0), wrapped into [0, N).  Any column with
            # at least one valid corner has flat0 in (-N, N), so one +N wrap suffices;
            # fully-out-of-volume columns may alias but contribute 0 via the weights.
            flat0 = d0i * HW + h0i * W + w0i                     # (1, tn) int32
            flat0 = jnp.where(flat0 < 0, flat0 + N, flat0)

            # one (24, rows) x (rows, tn) MXU matmul, row-tiled over the contraction axis
            if n_rblocks == 1:
                rows = lax.broadcasted_iota(jnp.int32, (tm, tn), 0)
                base = jnp.where(rows == flat0, 1.0, 0.0)
                out24 = jnp.dot(rstack[...], base, preferred_element_type=jnp.float32)
            else:
                def row_block(r, acc):
                    row0 = pl.multiple_of(r * tm, tm)
                    rows = lax.broadcasted_iota(jnp.int32, (tm, tn), 0) + row0
                    base = jnp.where(rows == flat0, 1.0, 0.0)    # (tm, tn) one-hot block
                    return acc + jnp.dot(rstack[:, pl.ds(row0, tm)], base,
                                         preferred_element_type=jnp.float32)
                out24 = lax.fori_loop(0, n_rblocks, row_block,
                                      jnp.zeros((24, tn), jnp.float32))

            # combine the eight (3, tn) gathered slices with the trilinear weights (VPU)
            warped = out24[0:3] * (md[0] * mh[0] * mw[0])
            for k, (a, b, c) in enumerate(_CORNERS[1:], start=1):
                warped = warped + out24[3 * k:3 * k + 3] * (md[a] * mh[b] * mw[c])

            flow_a[:, pl.ds(col0, tn)] = cur + warped            # lane-dense store

    out_ref[0] = flow_a[...]


@functools.lru_cache(maxsize=1)
def _vmem_capacity_bytes():
    try:
        return int(pltpu.get_tpu_info().vmem_capacity_bytes)
    except Exception:
        return 64 << 20          # conservative fallback (v7x-sized VMEM)


def _pick_tiles(N, budget_bytes):
    """Column tile tn (lane-dense), row tile tm (contraction axis), VMEM estimate."""
    tn = next((t for t in (1024, 512, 256, 128) if N % t == 0), N)
    # always-resident: flow_a + rstack + frozen (3,N) value + double-buffered
    # flow-in / flow-out (1,3,N) and grid (3,N) pipeline blocks
    fixed = (3 + 24 + 3 + 2 * 3 + 2 * 3 + 2 * 3) * N * 4
    per_tile_budget = max(budget_bytes - fixed, 2 << 20)
    cands = [t for t in (4096, 2048, 1024, 512, 256, 128) if N % t == 0] or [N]
    tm = cands[-1]
    for t in cands:                                   # largest row block that fits
        if (2 * t * tn + 2 * 24 * tn) * 4 <= per_tile_budget:
            tm = t
            break
    est = fixed + (2 * tm * tn + 2 * 24 * tn) * 4 + (4 << 20)
    return tn, tm, est


@functools.partial(jax.jit, static_argnames=("step",))
def vector_int(flow, step):
    """flow: [B, 3, D, H, W] float32  ->  integrated flow, same shape."""
    B, C, D, H, W = flow.shape
    assert C == 3
    assert D >= 2 and H >= 2 and W >= 2, "flat-index wrap assumes >=2 voxels per axis"
    N = D * H * W

    cap = _vmem_capacity_bytes()
    budget = (cap * 11) // 16        # ~44 MiB of 64 (v7x), ~88 MiB of 128 (v5e/v6e)
    tn, tm, est = _pick_tiles(N, budget)
    # honest limit: never declare below the estimate; physical capacity is the only cap
    vmem_limit = int(min(max(est, 32 << 20), cap))

    flow_flat = flow.reshape(B, 3, N).astype(jnp.float32)
    grid = _identity_grid(D, H, W).reshape(3, N)

    kernel = functools.partial(_vecint_kernel, D=D, H=H, W=W, step=step, tn=tn, tm=tm)
    out = pl.pallas_call(
        kernel,
        out_shape=jax.ShapeDtypeStruct((B, 3, N), jnp.float32),
        grid_spec=pltpu.PrefetchScalarGridSpec(
            num_scalar_prefetch=0,
            grid=(B,),
            in_specs=[
                pl.BlockSpec((1, 3, N), lambda b: (b, 0, 0)),
                pl.BlockSpec((3, N), lambda b: (0, 0)),   # identity grid, fetched once
            ],
            out_specs=pl.BlockSpec((1, 3, N), lambda b: (b, 0, 0)),
            scratch_shapes=[pltpu.VMEM((3, N), jnp.float32),     # flow_a
                            pltpu.VMEM((24, N), jnp.float32)],   # rolled corner stack
        ),
        input_output_aliases={0: 0},   # integrated flow overwrites the flow input buffer
        compiler_params=pltpu.CompilerParams(
            dimension_semantics=("parallel",),   # batch elems split across TCs on v7x
            vmem_limit_bytes=vmem_limit,
        ),
    )(flow_flat, grid)
    return out.reshape(B, 3, D, H, W)


# ---------------- pure-JAX reference (mirrors grid_sample semantics) ----------------
def _ref_warp(src, flow, grid):
    B, C, D, H, W = src.shape
    N = D * H * W
    p = flow + grid[None]
    d0 = jnp.floor(p[:, 0]); h0 = jnp.floor(p[:, 1]); w0 = jnp.floor(p[:, 2])
    fd = p[:, 0] - d0; fh = p[:, 1] - h0; fw = p[:, 2] - w0
    d0 = d0.astype(jnp.int32); h0 = h0.astype(jnp.int32); w0 = w0.astype(jnp.int32)
    src_flat = src.reshape(B, C, N)
    out = jnp.zeros_like(src)
    for a in (0, 1):
        di = d0 + a; wd = fd if a else 1.0 - fd
        vd = (di >= 0) & (di < D)
        for b in (0, 1):
            hi = h0 + b; wh = fh if b else 1.0 - fh
            vh = (hi >= 0) & (hi < H)
            for c in (0, 1):
                wi = w0 + c; ww = fw if c else 1.0 - fw
                vw = (wi >= 0) & (wi < W)
                wt = wd * wh * ww * (vd & vh & vw).astype(src.dtype)
                flat = (jnp.clip(di, 0, D - 1) * (H * W)
                        + jnp.clip(hi, 0, H - 1) * W
                        + jnp.clip(wi, 0, W - 1))
                idx = jnp.broadcast_to(flat.reshape(B, 1, N), (B, C, N))
                gathered = jnp.take_along_axis(src_flat, idx, axis=2)
                out = out + wt[:, None] * gathered.reshape(B, C, D, H, W)
    return out


def _ref_vector_int(flow, step):
    B, C, D, H, W = flow.shape
    grid = _identity_grid(D, H, W)
    flow = flow * (1.0 / 2 ** step)
    for _ in range(step):
        flow = flow + _ref_warp(flow, flow, grid)
    return flow


if __name__ == "__main__":
    B, D, H, W = 2, 8, 8, 8
    STEP = 4
    key = jax.random.PRNGKey(0)
    flow = jax.random.normal(key, (B, 3, D, H, W), dtype=jnp.float32) * 1.5

    out = jax.block_until_ready(vector_int(flow, step=STEP))
    ref = _ref_vector_int(flow, STEP)
    np.testing.assert_allclose(np.asarray(out), np.asarray(ref), atol=1e-4, rtol=1e-4)
    print("KERNEL_OK")
</pallas_src>

<mosaic_0001>
module attributes {stable_mosaic.version = 11 : i64} {
  func.func @_vecint_kernel(%arg0: i32, %arg1: memref<1x3x512xf32, #tpu.memory_space<vmem>>, %arg2: memref<3x512xf32, #tpu.memory_space<vmem>>, %arg3: memref<1x3x512xf32, #tpu.memory_space<vmem>>, %arg4: memref<3x512xf32, #tpu.memory_space<vmem>>, %arg5: memref<24x512xf32, #tpu.memory_space<vmem>>) attributes {dimension_semantics = [#tpu.dimension_semantics<parallel>], iteration_bounds = array<i64: 2>, scalar_prefetch = 0 : i64, scratch_operands = 2 : i64, tpu.core_type = #tpu.core_type<tc>, window_params = [{transform_indices = @transform_0, window_bounds = array<i64: 1, 3, 512>}, {pipeline_mode = #tpu.pipeline_mode<synchronous>, transform_indices = @transform_1, window_bounds = array<i64: 3, 512>}, {transform_indices = @transform_2, window_bounds = array<i64: 1, 3, 512>}]} {
    %c0 = arith.constant 0 : index
    %c0_0 = arith.constant 0 : index
    %c0_1 = arith.constant 0 : index
    %0 = vector.load %arg1[%c0, %c0_0, %c0_1] : memref<1x3x512xf32, #tpu.memory_space<vmem>>, vector<1x3x512xf32>
    %1 = vector.shape_cast %0 : vector<1x3x512xf32> to vector<3x512xf32>
    %cst = arith.constant 6.250000e-02 : f32
    %2 = vector.broadcast %cst : f32 to vector<3x512xf32>
    %3 = arith.mulf %1, %2 : vector<3x512xf32>
    %c0_2 = arith.constant 0 : index
    %c0_3 = arith.constant 0 : index
    %4 = vector.load %arg4[%c0_2, %c0_3] : memref<3x512xf32, #tpu.memory_space<vmem>>, vector<3x512xf32>
    tpu.vector_store %arg4[%c0_2, %c0_3], %3 {strides = array<i32>} : memref<3x512xf32, #tpu.memory_space<vmem>>, vector<3x512xf32>,
    %c0_i32 = arith.constant 0 : i32
    %c4_i32 = arith.constant 4 : i32
    %5 = arith.addi %c0_i32, %c4_i32 : i32
    %c1_i32 = arith.constant 1 : i32
    scf.for %arg6 = %c0_i32 to %5 step %c1_i32  : i32 {
      %c0_9 = arith.constant 0 : index
      %c0_10 = arith.constant 0 : index
      %10 = vector.load %arg4[%c0_9, %c0_10] : memref<3x512xf32, #tpu.memory_space<vmem>>, vector<3x512xf32>
      %11 = vector.extract_strided_slice %10 {offsets = [0, 0], sizes = [1, 512], strides = [1, 1]} : vector<3x512xf32> to vector<1x512xf32>
      %c0_11 = arith.constant 0 : index
      %c0_12 = arith.constant 0 : index
      %12 = vector.load %arg5[%c0_11, %c0_12] : memref<24x512xf32, #tpu.memory_space<vmem>>, vector<1x512xf32>
      tpu.vector_store %arg5[%c0_11, %c0_12], %11 {strides = array<i32>} : memref<24x512xf32, #tpu.memory_space<vmem>>, vector<1x512xf32>,
      %13 = vector.extract_strided_slice %10 {offsets = [1, 0], sizes = [1, 512], strides = [1, 1]} : vector<3x512xf32> to vector<1x512xf32>
      %c1 = arith.constant 1 : index
      %c0_13 = arith.constant 0 : index
      %14 = vector.load %arg5[%c1, %c0_13] : memref<24x512xf32, #tpu.memory_space<vmem>>, vector<1x512xf32>
      tpu.vector_store %arg5[%c1, %c0_13], %13 {strides = array<i32>} : memref<24x512xf32, #tpu.memory_space<vmem>>, vector<1x512xf32>,
      %15 = vector.extract_strided_slice %10 {offsets = [2, 0], sizes = [1, 512], strides = [1, 1]} : vector<3x512xf32> to vector<1x512xf32>
      %c2 = arith.constant 2 : index
      %c0_14 = arith.constant 0 : index
      %16 = vector.load %arg5[%c2, %c0_14] : memref<24x512xf32, #tpu.memory_space<vmem>>, vector<1x512xf32>
      tpu.vector_store %arg5[%c2, %c0_14], %15 {strides = array<i32>} : memref<24x512xf32, #tpu.memory_space<vmem>>, vector<1x512xf32>,
      %c511_i32 = arith.constant 511 : i32
      %17 = tpu.dynamic_rotate %10 by %c511_i32 dim 1 : vector<3x512xf32>, i32 -> vector<3x512xf32>
      %18 = vector.extract_strided_slice %17 {offsets = [0, 0], sizes = [1, 512], strides = [1, 1]} : vector<3x512xf32> to vector<1x512xf32>
      %c3 = arith.constant 3 : index
      %c0_15 = arith.constant 0 : index
      %19 = vector.load %arg5[%c3, %c0_15] : memref<24x512xf32, #tpu.memory_space<vmem>>, vector<1x512xf32>
      tpu.vector_store %arg5[%c3, %c0_15], %18 {strides = array<i32>} : memref<24x512xf32, #tpu.memory_space<vmem>>, vector<1x512xf32>,
      %20 = vector.extract_strided_slice %17 {offsets = [1, 0], sizes = [1, 512], strides = [1, 1]} : vector<3x512xf32> to vector<1x512xf32>
      %c4 = arith.constant 4 : index
      %c0_16 = arith.constant 0 : index
      %21 = vector.load %arg5[%c4, %c0_16] : memref<24x512xf32, #tpu.memory_space<vmem>>, vector<1x512xf32>
      tpu.vector_store %arg5[%c4, %c0_16], %20 {strides = array<i32>} : memref<24x512xf32, #tpu.memory_space<vmem>>, vector<1x512xf32>,
      %22 = vector.extract_strided_slice %17 {offsets = [2, 0], sizes = [1, 512], strides = [1, 1]} : vector<3x512xf32> to vector<1x512xf32>
      %c5 = arith.constant 5 : index
      %c0_17 = arith.constant 0 : index
      %23 = vector.load %arg5[%c5, %c0_17] : memref<24x512xf32, #tpu.memory_space<vmem>>, vector<1x512xf32>
      tpu.vector_store %arg5[%c5, %c0_17], %22 {strides = array<i32>} : memref<24x512xf32, #tpu.memory_space<vmem>>, vector<1x512xf32>,
      %c504_i32 = arith.constant 504 : i32
      %24 = tpu.dynamic_rotate %10 by %c504_i32 dim 1 : vector<3x512xf32>, i32 -> vector<3x512xf32>
      %25 = vector.extract_strided_slice %24 {offsets = [0, 0], sizes = [1, 512], strides = [1, 1]} : vector<3x512xf32> to vector<1x512xf32>
      %c6 = arith.constant 6 : index
      %c0_18 = arith.constant 0 : index
      %26 = vector.load %arg5[%c6, %c0_18] : memref<24x512xf32, #tpu.memory_space<vmem>>, vector<1x512xf32>
      tpu.vector_store %arg5[%c6, %c0_18], %25 {strides = array<i32>} : memref<24x512xf32, #tpu.memory_space<vmem>>, vector<1x512xf32>,
      %27 = vector.extract_strided_slice %24 {offsets = [1, 0], sizes = [1, 512], strides = [1, 1]} : vector<3x512xf32> to vector<1x512xf32>
      %c7 = arith.constant 7 : index
      %c0_19 = arith.constant 0 : index
      %28 = vector.load %arg5[%c7, %c0_19] : memref<24x512xf32, #tpu.memory_space<vmem>>, vector<1x512xf32>
      tpu.vector_store %arg5[%c7, %c0_19], %27 {strides = array<i32>} : memref<24x512xf32, #tpu.memory_space<vmem>>, vector<1x512xf32>,
      %29 = vector.extract_strided_slice %24 {offsets = [2, 0], sizes = [1, 512], strides = [1, 1]} : vector<3x512xf32> to vector<1x512xf32>
      %c8 = arith.constant 8 : index
      %c0_20 = arith.constant 0 : index
      %30 = vector.load %arg5[%c8, %c0_20] : memref<24x512xf32, #tpu.memory_space<vmem>>, vector<1x512xf32>
      tpu.vector_store %arg5[%c8, %c0_20], %29 {strides = array<i32>} : memref<24x512xf32, #tpu.memory_space<vmem>>, vector<1x512xf32>,
      %c503_i32 = arith.constant 503 : i32
      %31 = tpu.dynamic_rotate %10 by %c503_i32 dim 1 : vector<3x512xf32>, i32 -> vector<3x512xf32>
      %32 = vector.extract_strided_slice %31 {offsets = [0, 0], sizes = [1, 512], strides = [1, 1]} : vector<3x512xf32> to vector<1x512xf32>
      %c9 = arith.constant 9 : index
      %c0_21 = arith.constant 0 : index
      %33 = vector.load %arg5[%c9, %c0_21] : memref<24x512xf32, #tpu.memory_space<vmem>>, vector<1x512xf32>
      tpu.vector_store %arg5[%c9, %c0_21], %32 {strides = array<i32>} : memref<24x512xf32, #tpu.memory_space<vmem>>, vector<1x512xf32>,
      %34 = vector.extract_strided_slice %31 {offsets = [1, 0], sizes = [1, 512], strides = [1, 1]} : vector<3x512xf32> to vector<1x512xf32>
      %c10 = arith.constant 10 : index
      %c0_22 = arith.constant 0 : index
      %35 = vector.load %arg5[%c10, %c0_22] : memref<24x512xf32, #tpu.memory_space<vmem>>, vector<1x512xf32>
      tpu.vector_store %arg5[%c10, %c0_22], %34 {strides = array<i32>} : memref<24x512xf32, #tpu.memory_space<vmem>>, vector<1x512xf32>,
      %36 = vector.extract_strided_slice %31 {offsets = [2, 0], sizes = [1, 512], strides = [1, 1]} : vector<3x512xf32> to vector<1x512xf32>
      %c11 = arith.constant 11 : index
      %c0_23 = arith.constant 0 : index
      %37 = vector.load %arg5[%c11, %c0_23] : memref<24x512xf32, #tpu.memory_space<vmem>>, vector<1x512xf32>
      tpu.vector_store %arg5[%c11, %c0_23], %36 {strides = array<i32>} : memref<24x512xf32, #tpu.memory_space<vmem>>, vector<1x512xf32>,
      %c448_i32 = arith.constant 448 : i32
      %38 = tpu.dynamic_rotate %10 by %c448_i32 dim 1 : vector<3x512xf32>, i32 -> vector<3x512xf32>
      %39 = vector.extract_strided_slice %38 {offsets = [0, 0], sizes = [1, 512], strides = [1, 1]} : vector<3x512xf32> to vector<1x512xf32>
      %c12 = arith.constant 12 : index
      %c0_24 = arith.constant 0 : index
      %40 = vector.load %arg5[%c12, %c0_24] : memref<24x512xf32, #tpu.memory_space<vmem>>, vector<1x512xf32>
      tpu.vector_store %arg5[%c12, %c0_24], %39 {strides = array<i32>} : memref<24x512xf32, #tpu.memory_space<vmem>>, vector<1x512xf32>,
      %41 = vector.extract_strided_slice %38 {offsets = [1, 0], sizes = [1, 512], strides = [1, 1]} : vector<3x512xf32> to vector<1x512xf32>
      %c13 = arith.constant 13 : index
      %c0_25 = arith.constant 0 : index
      %42 = vector.load %arg5[%c13, %c0_25] : memref<24x512xf32, #tpu.memory_space<vmem>>, vector<1x512xf32>
      tpu.vector_store %arg5[%c13, %c0_25], %41 {strides = array<i32>} : memref<24x512xf32, #tpu.memory_space<vmem>>, vector<1x512xf32>,
      %43 = vector.extract_strided_slice %38 {offsets = [2, 0], sizes = [1, 512], strides = [1, 1]} : vector<3x512xf32> to vector<1x512xf32>
      %c14 = arith.constant 14 : index
      %c0_26 = arith.constant 0 : index
      %44 = vector.load %arg5[%c14, %c0_26] : memref<24x512xf32, #tpu.memory_space<vmem>>, vector<1x512xf32>
      tpu.vector_store %arg5[%c14, %c0_26], %43 {strides = array<i32>} : memref<24x512xf32, #tpu.memory_space<vmem>>, vector<1x512xf32>,
      %c447_i32 = arith.constant 447 : i32
      %45 = tpu.dynamic_rotate %10 by %c447_i32 dim 1 : vector<3x512xf32>, i32 -> vector<3x512xf32>
      %46 = vector.extract_strided_slice %45 {offsets = [0, 0], sizes = [1, 512], strides = [1, 1]} : vector<3x512xf32> to vector<1x512xf32>
      %c15 = arith.constant 15 : index
      %c0_27 = arith.constant 0 : index
      %47 = vector.load %arg5[%c15, %c0_27] : memref<24x512xf32, #tpu.memory_space<vmem>>, vector<1x512xf32>
      tpu.vector_store %arg5[%c15, %c0_27], %46 {strides = array<i32>} : memref<24x512xf32, #tpu.memory_space<vmem>>, vector<1x512xf32>,
      %48 = vector.extract_strided_slice %45 {offsets = [1, 0], sizes = [1, 512], strides = [1, 1]} : vector<3x512xf32> to vector<1x512xf32>
      %c16 = arith.constant 16 : index
      %c0_28 = arith.constant 0 : index
      %49 = vector.load %arg5[%c16, %c0_28] : memref<24x512xf32, #tpu.memory_space<vmem>>, vector<1x512xf32>
      tpu.vector_store %arg5[%c16, %c0_28], %48 {strides = array<i32>} : memref<24x512xf32, #tpu.memory_space<vmem>>, vector<1x512xf32>,
      %50 = vector.extract_strided_slice %45 {offsets = [2, 0], sizes = [1, 512], strides = [1, 1]} : vector<3x512xf32> to vector<1x512xf32>
      %c17 = arith.constant 17 : index
      %c0_29 = arith.constant 0 : index
      %51 = vector.load %arg5[%c17, %c0_29] : memref<24x512xf32, #tpu.memory_space<vmem>>, vector<1x512xf32>
      tpu.vector_store %arg5[%c17, %c0_29], %50 {strides = array<i32>} : memref<24x512xf32, #tpu.memory_space<vmem>>, vector<1x512xf32>,
      %c440_i32 = arith.constant 440 : i32
      %52 = tpu.dynamic_rotate %10 by %c440_i32 dim 1 : vector<3x512xf32>, i32 -> vector<3x512xf32>
      %53 = vector.extract_strided_slice %52 {offsets = [0, 0], sizes = [1, 512], strides = [1, 1]} : vector<3x512xf32> to vector<1x512xf32>
      %c18 = arith.constant 18 : index
      %c0_30 = arith.constant 0 : index
      %54 = vector.load %arg5[%c18, %c0_30] : memref<24x512xf32, #tpu.memory_space<vmem>>, vector<1x512xf32>
      tpu.vector_store %arg5[%c18, %c0_30], %53 {strides = array<i32>} : memref<24x512xf32, #tpu.memory_space<vmem>>, vector<1x512xf32>,
      %55 = vector.extract_strided_slice %52 {offsets = [1, 0], sizes = [1, 512], strides = [1, 1]} : vector<3x512xf32> to vector<1x512xf32>
      %c19 = arith.constant 19 : index
      %c0_31 = arith.constant 0 : index
      %56 = vector.load %arg5[%c19, %c0_31] : memref<24x512xf32, #tpu.memory_space<vmem>>, vector<1x512xf32>
      tpu.vector_store %arg5[%c19, %c0_31], %55 {strides = array<i32>} : memref<24x512xf32, #tpu.memory_space<vmem>>, vector<1x512xf32>,
      %57 = vector.extract_strided_slice %52 {offsets = [2, 0], sizes = [1, 512], strides = [1, 1]} : vector<3x512xf32> to vector<1x512xf32>
      %c20 = arith.constant 20 : index
      %c0_32 = arith.constant 0 : index
      %58 = vector.load %arg5[%c20, %c0_32] : memref<24x512xf32, #tpu.memory_space<vmem>>, vector<1x512xf32>
      tpu.vector_store %arg5[%c20, %c0_32], %57 {strides = array<i32>} : memref<24x512xf32, #tpu.memory_space<vmem>>, vector<1x512xf32>,
      %c439_i32 = arith.constant 439 : i32
      %59 = tpu.dynamic_rotate %10 by %c439_i32 dim 1 : vector<3x512xf32>, i32 -> vector<3x512xf32>
      %60 = vector.extract_strided_slice %59 {offsets = [0, 0], sizes = [1, 512], strides = [1, 1]} : vector<3x512xf32> to vector<1x512xf32>
      %c21 = arith.constant 21 : index
      %c0_33 = arith.constant 0 : index
      %61 = vector.load %arg5[%c21, %c0_33] : memref<24x512xf32, #tpu.memory_space<vmem>>, vector<1x512xf32>
      tpu.vector_store %arg5[%c21, %c0_33], %60 {strides = array<i32>} : memref<24x512xf32, #tpu.memory_space<vmem>>, vector<1x512xf32>,
      %62 = vector.extract_strided_slice %59 {offsets = [1, 0], sizes = [1, 512], strides = [1, 1]} : vector<3x512xf32> to vector<1x512xf32>
      %c22 = arith.constant 22 : index
      %c0_34 = arith.constant 0 : index
      %63 = vector.load %arg5[%c22, %c0_34] : memref<24x512xf32, #tpu.memory_space<vmem>>, vector<1x512xf32>
      tpu.vector_store %arg5[%c22, %c0_34], %62 {strides = array<i32>} : memref<24x512xf32, #tpu.memory_space<vmem>>, vector<1x512xf32>,
      %64 = vector.extract_strided_slice %59 {offsets = [2, 0], sizes = [1, 512], strides = [1, 1]} : vector<3x512xf32> to vector<1x512xf32>
      %c23 = arith.constant 23 : index
      %c0_35 = arith.constant 0 : index
      %65 = vector.load %arg5[%c23, %c0_35] : memref<24x512xf32, #tpu.memory_space<vmem>>, vector<1x512xf32>
      tpu.vector_store %arg5[%c23, %c0_35], %64 {strides = array<i32>} : memref<24x512xf32, #tpu.memory_space<vmem>>, vector<1x512xf32>,
      %c0_i32_36 = arith.constant 0 : i32
      %c1_i32_37 = arith.constant 1 : i32
      %66 = arith.muli %c0_i32_36, %c1_i32_37 : i32
      %c0_i32_38 = arith.constant 0 : i32
      %67 = arith.addi %c0_i32_38, %66 : i32
      %c512_i32 = arith.constant 512 : i32
      %68 = arith.muli %67, %c512_i32 : i32
      %69 = tpu.assume_multiple %68, 512 : i32
      %c0_39 = arith.constant 0 : index
      %70 = arith.index_cast %69 : i32 to index
      %71 = vector.load %arg4[%c0_39, %70] : memref<3x512xf32, #tpu.memory_space<vmem>>, vector<3x512xf32>
      %c0_40 = arith.constant 0 : index
      %72 = arith.index_cast %69 : i32 to index
      %73 = vector.load %arg2[%c0_40, %72] : memref<3x512xf32, #tpu.memory_space<vmem>>, vector<3x512xf32>
      %74 = arith.addf %71, %73 : vector<3x512xf32>
      %75 = math.floor %74 : vector<3x512xf32>
      %76 = arith.subf %74, %75 : vector<3x512xf32>
      %77 = arith.fptosi %75 : vector<3x512xf32> to vector<3x512xi32>
      %78 = vector.extract_strided_slice %77 {offsets = [0, 0], sizes = [1, 512], strides = [1, 1]} : vector<3x512xi32> to vector<1x512xi32>
      %79 = vector.extract_strided_slice %77 {offsets = [1, 0], sizes = [1, 512], strides = [1, 1]} : vector<3x512xi32> to vector<1x512xi32>
      %80 = vector.extract_strided_slice %77 {offsets = [2, 0], sizes = [1, 512], strides = [1, 1]} : vector<3x512xi32> to vector<1x512xi32>
      %81 = vector.extract_strided_slice %76 {offsets = [0, 0], sizes = [1, 512], strides = [1, 1]} : vector<3x512xf32> to vector<1x512xf32>
      %82 = vector.extract_strided_slice %76 {offsets = [1, 0], sizes = [1, 512], strides = [1, 1]} : vector<3x512xf32> to vector<1x512xf32>
      %83 = vector.extract_strided_slice %76 {offsets = [2, 0], sizes = [1, 512], strides = [1, 1]} : vector<3x512xf32> to vector<1x512xf32>
      %c0_i32_41 = arith.constant 0 : i32
      %84 = vector.broadcast %c0_i32_41 : i32 to vector<1x512xi32>
      %85 = arith.cmpi sge, %78, %84 : vector<1x512xi32>
      %c8_i32 = arith.constant 8 : i32
      %86 = vector.broadcast %c8_i32 : i32 to vector<1x512xi32>
      %87 = arith.cmpi slt, %78, %86 : vector<1x512xi32>
      %88 = arith.andi %85, %87 : vector<1x512xi1>
      %cst_42 = arith.constant 1.000000e+00 : f32
      %89 = vector.broadcast %cst_42 : f32 to vector<1x512xf32>
      %90 = arith.subf %89, %81 : vector<1x512xf32>
      %cst_43 = arith.constant 0.000000e+00 : f32
      %91 = vector.broadcast %cst_43 : f32 to vector<1x512xf32>
      %92 = arith.select %88, %90, %91 : vector<1x512xi1>, vector<1x512xf32>
      %c-1_i32 = arith.constant -1 : i32
      %93 = vector.broadcast %c-1_i32 : i32 to vector<1x512xi32>
      %94 = arith.cmpi sge, %78, %93 : vector<1x512xi32>
      %c7_i32 = arith.constant 7 : i32
      %95 = vector.broadcast %c7_i32 : i32 to vector<1x512xi32>
      %96 = arith.cmpi slt, %78, %95 : vector<1x512xi32>
      %97 = arith.andi %94, %96 : vector<1x512xi1>
      %cst_44 = arith.constant 0.000000e+00 : f32
      %98 = vector.broadcast %cst_44 : f32 to vector<1x512xf32>
      %99 = arith.select %97, %81, %98 : vector<1x512xi1>, vector<1x512xf32>
      %c0_i32_45 = arith.constant 0 : i32
      %100 = vector.broadcast %c0_i32_45 : i32 to vector<1x512xi32>
      %101 = arith.cmpi sge, %79, %100 : vector<1x512xi32>
      %c8_i32_46 = arith.constant 8 : i32
      %102 = vector.broadcast %c8_i32_46 : i32 to vector<1x512xi32>
      %103 = arith.cmpi slt, %79, %102 : vector<1x512xi32>
      %104 = arith.andi %101, %103 : vector<1x512xi1>
      %cst_47 = arith.constant 1.000000e+00 : f32
      %105 = vector.broadcast %cst_47 : f32 to vector<1x512xf32>
      %106 = arith.subf %105, %82 : vector<1x512xf32>
      %cst_48 = arith.constant 0.000000e+00 : f32
      %107 = vector.broadcast %cst_48 : f32 to vector<1x512xf32>
      %108 = arith.select %104, %106, %107 : vector<1x512xi1>, vector<1x512xf32>
      %c-1_i32_49 = arith.constant -1 : i32
      %109 = vector.broadcast %c-1_i32_49 : i32 to vector<1x512xi32>
      %110 = arith.cmpi sge, %79, %109 : vector<1x512xi32>
      %c7_i32_50 = arith.constant 7 : i32
      %111 = vector.broadcast %c7_i32_50 : i32 to vector<1x512xi32>
      %112 = arith.cmpi slt, %79, %111 : vector<1x512xi32>
      %113 = arith.andi %110, %112 : vector<1x512xi1>
      %cst_51 = arith.constant 0.000000e+00 : f32
      %114 = vector.broadcast %cst_51 : f32 to vector<1x512xf32>
      %115 = arith.select %113, %82, %114 : vector<1x512xi1>, vector<1x512xf32>
      %c0_i32_52 = arith.constant 0 : i32
      %116 = vector.broadcast %c0_i32_52 : i32 to vector<1x512xi32>
      %117 = arith.cmpi sge, %80, %116 : vector<1x512xi32>
      %c8_i32_53 = arith.constant 8 : i32
      %118 = vector.broadcast %c8_i32_53 : i32 to vector<1x512xi32>
      %119 = arith.cmpi slt, %80, %118 : vector<1x512xi32>
      %120 = arith.andi %117, %119 : vector<1x512xi1>
      %cst_54 = arith.constant 1.000000e+00 : f32
      %121 = vector.broadcast %cst_54 : f32 to vector<1x512xf32>
      %122 = arith.subf %121, %83 : vector<1x512xf32>
      %cst_55 = arith.constant 0.000000e+00 : f32
      %123 = vector.broadcast %cst_55 : f32 to vector<1x512xf32>
      %124 = arith.select %120, %122, %123 : vector<1x512xi1>, vector<1x512xf32>
      %c-1_i32_56 = arith.constant -1 : i32
      %125 = vector.broadcast %c-1_i32_56 : i32 to vector<1x512xi32>
      %126 = arith.cmpi sge, %80, %125 : vector<1x512xi32>
      %c7_i32_57 = arith.constant 7 : i32
      %127 = vector.broadcast %c7_i32_57 : i32 to vector<1x512xi32>
      %128 = arith.cmpi slt, %80, %127 : vector<1x512xi32>
      %129 = arith.andi %126, %128 : vector<1x512xi1>
      %cst_58 = arith.constant 0.000000e+00 : f32
      %130 = vector.broadcast %cst_58 : f32 to vector<1x512xf32>
      %131 = arith.select %129, %83, %130 : vector<1x512xi1>, vector<1x512xf32>
      %c64_i32 = arith.constant 64 : i32
      %132 = vector.broadcast %c64_i32 : i32 to vector<1x512xi32>
      %133 = arith.muli %78, %132 : vector<1x512xi32>
      %c8_i32_59 = arith.constant 8 : i32
      %134 = vector.broadcast %c8_i32_59 : i32 to vector<1x512xi32>
      %135 = arith.muli %79, %134 : vector<1x512xi32>
      %136 = arith.addi %133, %135 : vector<1x512xi32>
      %137 = arith.addi %136, %80 : vector<1x512xi32>
      %c0_i32_60 = arith.constant 0 : i32
      %138 = vector.broadcast %c0_i32_60 : i32 to vector<1x512xi32>
      %139 = arith.cmpi slt, %137, %138 : vector<1x512xi32>
      %c512_i32_61 = arith.constant 512 : i32
      %140 = vector.broadcast %c512_i32_61 : i32 to vector<1x512xi32>
      %141 = arith.addi %137, %140 : vector<1x512xi32>
      %142 = arith.select %139, %141, %137 : vector<1x512xi1>, vector<1x512xi32>
      %143 = tpu.iota {dimensions = array<i32: 0>} : vector<512x512xi32>
      %144 = vector.broadcast %142 : vector<1x512xi32> to vector<512x512xi32>
      %145 = arith.cmpi eq, %143, %144 : vector<512x512xi32>
      %cst_62 = arith.constant 1.000000e+00 : f32
      %cst_63 = arith.constant 0.000000e+00 : f32
      %146 = vector.broadcast %cst_62 : f32 to vector<512x512xf32>
      %147 = vector.broadcast %cst_63 : f32 to vector<512x512xf32>
      %148 = arith.select %145, %146, %147 : vector<512x512xi1>, vector<512x512xf32>
      %c0_64 = arith.constant 0 : index
      %c0_65 = arith.constant 0 : index
      %149 = vector.load %arg5[%c0_64, %c0_65] : memref<24x512xf32, #tpu.memory_space<vmem>>, vector<24x512xf32>
      %cst_66 = arith.constant dense<0.000000e+00> : vector<24x512xf32>
      %150 = tpu.matmul %149, %148, %cst_66 {dimension_numbers = #tpu.dot_dimension_numbers<[1], [0], [0], [1], [0, 0, 1, 1], [], []>} : vector<24x512xf32>, vector<512x512xf32>, vector<24x512xf32> -> vector<24x512xf32>
      %151 = vector.extract_strided_slice %150 {offsets = [0, 0], sizes = [3, 512], strides = [1, 1]} : vector<24x512xf32> to vector<3x512xf32>
      %152 = arith.mulf %92, %108 : vector<1x512xf32>
      %153 = arith.mulf %152, %124 : vector<1x512xf32>
      %154 = vector.broadcast %153 : vector<1x512xf32> to vector<3x512xf32>
      %155 = arith.mulf %151, %154 : vector<3x512xf32>
      %156 = vector.extract_strided_slice %150 {offsets = [3, 0], sizes = [3, 512], strides = [1, 1]} : vector<24x512xf32> to vector<3x512xf32>
      %157 = arith.mulf %92, %108 : vector<1x512xf32>
      %158 = arith.mulf %157, %131 : vector<1x512xf32>
      %159 = vector.broadcast %158 : vector<1x512xf32> to vector<3x512xf32>
      %160 = arith.mulf %156, %159 : vector<3x512xf32>
      %161 = arith.addf %155, %160 : vector<3x512xf32>
      %162 = vector.extract_strided_slice %150 {offsets = [6, 0], sizes = [3, 512], strides = [1, 1]} : vector<24x512xf32> to vector<3x512xf32>
      %163 = arith.mulf %92, %115 : vector<1x512xf32>
      %164 = arith.mulf %163, %124 : vector<1x512xf32>
      %165 = vector.broadcast %164 : vector<1x512xf32> to vector<3x512xf32>
      %166 = arith.mulf %162, %165 : vector<3x512xf32>
      %167 = arith.addf %161, %166 : vector<3x512xf32>
      %168 = vector.extract_strided_slice %150 {offsets = [9, 0], sizes = [3, 512], strides = [1, 1]} : vector<24x512xf32> to vector<3x512xf32>
      %169 = arith.mulf %92, %115 : vector<1x512xf32>
      %170 = arith.mulf %169, %131 : vector<1x512xf32>
      %171 = vector.broadcast %170 : vector<1x512xf32> to vector<3x512xf32>
      %172 = arith.mulf %168, %171 : vector<3x512xf32>
      %173 = arith.addf %167, %172 : vector<3x512xf32>
      %174 = vector.extract_strided_slice %150 {offsets = [12, 0], sizes = [3, 512], strides = [1, 1]} : vector<24x512xf32> to vector<3x512xf32>
      %175 = arith.mulf %99, %108 : vector<1x512xf32>
      %176 = arith.mulf %175, %124 : vector<1x512xf32>
      %177 = vector.broadcast %176 : vector<1x512xf32> to vector<3x512xf32>
      %178 = arith.mulf %174, %177 : vector<3x512xf32>
      %179 = arith.addf %173, %178 : vector<3x512xf32>
      %180 = vector.extract_strided_slice %150 {offsets = [15, 0], sizes = [3, 512], strides = [1, 1]} : vector<24x512xf32> to vector<3x512xf32>
      %181 = arith.mulf %99, %108 : vector<1x512xf32>
      %182 = arith.mulf %181, %131 : vector<1x512xf32>
      %183 = vector.broadcast %182 : vector<1x512xf32> to vector<3x512xf32>
      %184 = arith.mulf %180, %183 : vector<3x512xf32>
      %185 = arith.addf %179, %184 : vector<3x512xf32>
      %186 = vector.extract_strided_slice %150 {offsets = [18, 0], sizes = [3, 512], strides = [1, 1]} : vector<24x512xf32> to vector<3x512xf32>
      %187 = arith.mulf %99, %115 : vector<1x512xf32>
      %188 = arith.mulf %187, %124 : vector<1x512xf32>
      %189 = vector.broadcast %188 : vector<1x512xf32> to vector<3x512xf32>
      %190 = arith.mulf %186, %189 : vector<3x512xf32>
      %191 = arith.addf %185, %190 : vector<3x512xf32>
      %192 = vector.extract_strided_slice %150 {offsets = [21, 0], sizes = [3, 512], strides = [1, 1]} : vector<24x512xf32> to vector<3x512xf32>
      %193 = arith.mulf %99, %115 : vector<1x512xf32>
      %194 = arith.mulf %193, %131 : vector<1x512xf32>
      %195 = vector.broadcast %194 : vector<1x512xf32> to vector<3x512xf32>
      %196 = arith.mulf %192, %195 : vector<3x512xf32>
      %197 = arith.addf %191, %196 : vector<3x512xf32>
      %198 = arith.addf %71, %197 : vector<3x512xf32>
      %c0_67 = arith.constant 0 : index
      %199 = arith.index_cast %69 : i32 to index
      %200 = vector.load %arg4[%c0_67, %199] : memref<3x512xf32, #tpu.memory_space<vmem>>, vector<3x512xf32>
      tpu.vector_store %arg4[%c0_67, %199], %198 {strides = array<i32>} : memref<3x512xf32, #tpu.memory_space<vmem>>, vector<3x512xf32>,
      %c1_i32_68 = arith.constant 1 : i32
    }
    %c0_4 = arith.constant 0 : index
    %c0_5 = arith.constant 0 : index
    %6 = vector.load %arg4[%c0_4, %c0_5] : memref<3x512xf32, #tpu.memory_space<vmem>>, vector<3x512xf32>
    %c0_6 = arith.constant 0 : index
    %c0_7 = arith.constant 0 : index
    %c0_8 = arith.constant 0 : index
    %7 = vector.load %arg3[%c0_6, %c0_7, %c0_8] : memref<1x3x512xf32, #tpu.memory_space<vmem>>, vector<1x3x512xf32>
    %8 = vector.shape_cast %7 : vector<1x3x512xf32> to vector<3x512xf32>
    %9 = vector.shape_cast %6 : vector<3x512xf32> to vector<1x3x512xf32>
    tpu.vector_store %arg3[%c0_6, %c0_7, %c0_8], %9 {strides = array<i32>} : memref<1x3x512xf32, #tpu.memory_space<vmem>>, vector<1x3x512xf32>,
    return
  }
  func.func @transform_0(%arg0: i32) -> (i32, i32, i32) {
    %c0_i32 = arith.constant 0 : i32
    %c0_i32_0 = arith.constant 0 : i32
    %c0_i32_1 = arith.constant 0 : i32
    return %arg0, %c0_i32, %c0_i32_0 : i32, i32, i32
  }
  func.func @transform_1(%arg0: i32) -> (i32, i32) {
    %c0_i32 = arith.constant 0 : i32
    %c0_i32_0 = arith.constant 0 : i32
    %c0_i32_1 = arith.constant 0 : i32
    return %c0_i32, %c0_i32_0 : i32, i32
  }
  func.func @transform_2(%arg0: i32) -> (i32, i32, i32) {
    %c0_i32 = arith.constant 0 : i32
    %c0_i32_0 = arith.constant 0 : i32
    %c0_i32_1 = arith.constant 0 : i32
    return %arg0, %c0_i32, %c0_i32_0 : i32, i32, i32
  }
}

</mosaic_0001>

<llo_original>
// kernel: vector_int.1
$region0: #{vector_int.1}
  #allocation0 [shape = 'u32[]', space=smem, size = 0x4, offset = 0x4, fixed_abs, tag = 'smem constant byte address 0x4 - core index']
  #allocation1 [shape = 'u32[144,128]{1,0:T(1,128)}', space=vmem, size = 0x12000, scoped, tag = 'internal scratch']
  #allocation2 [shape = 'f32[3,512]{1,0:T(4,128)}', space=vmem, size = 0x2000, scoped, tag = 'scratch operand']
  #allocation3 [shape = 'f32[24,512]{1,0:T(8,128)}', space=vmem, size = 0xc000, scoped, tag = 'scratch operand']
  %s0 = inlined_call_operand.vmem [shape: f32[2,3,512], index: 0, kind: input, shape index: {}, may-alias: {0,2}]
  %s1 = inlined_call_operand.vmem [shape: f32[3,512], index: 1, kind: input, shape index: {}]
  %s2 = inlined_call_operand.vmem [shape: f32[2,3,512], index: 2, kind: output, shape index: {}, may-alias: {0,2}]
  %s3 = sld [smem:[#allocation0]]
  $region48: #{vector_int.1} parent=0
    _
  %s5 = ssub.s32 1, %s3
  %s6 = scalar_select 0, %s5, %s3
  loop: start=0, step=1, limit=4
  $region2: #{vector_int.1} parent=0 // loop_pre_header
    _
  $region3: #{vector_int.1} parent=0 // loop_header
    %s8 = sphi 0, %s12
    %p9 = scmp.ge.s32.totalorder %s8, 4
    %s18 = sphi 0, %s20
    %s21 = sphi 0, %s18
    %s22 = sphi 0, %s21
    %s38 = sphi 0, %s22
    %s42 = sphi 0, %s42
    %s44 = sphi 0, %s42
    %s45 = sphi 0, %s44
    %s59 = sphi 0, %s45
    %s65 = sphi 0, %s67
    %s68 = sphi 0, %s65
    %s69 = sphi 0, %s68
    %s85 = sphi 0, %s69
  $region4: #{vector_int.1} parent=0 // loop_header_branch
    %11 = sbr.rel (%p9) target = $region8
  $region5: #{vector_int.1} parent=0 // loop_body
    %s13 = ssub.s32 %s8, 1
    %s14 = ssub.s32 %s8, 2
    %s15 = sadd.s32 %s8, 1
    %s16 = ssub.s32 %s8, %s15
    %p17 = scmp.eq.s32.totalorder %s16, 0
    %s19 = sadd.s32 %s18, 1
    %s20 = scalar_select %p17, %s18, %s19
    %p23 = pneg %p17
    %p24 = scmp.eq.s32.totalorder %s8, 1
    %p25 = por %p23, %p24
    %p26 = scmp.ne.s32.totalorder %s18, %s21
    %p27 = scmp.eq.s32.totalorder %s8, 0
    %p28 = por %p26, %p27
    %p29 = scmp.ne.s32.totalorder %s18, %s21
    %p30 = scmp.eq.s32.totalorder %s13, 1
    %p31 = por %p29, %p30
    %p32 = scmp.ne.s32.totalorder %s21, %s22
    %p33 = scmp.eq.s32.totalorder %s13, 0
    %p34 = por %p32, %p33
    %p35 = scmp.ne.s32.totalorder %s21, %s22
    %p36 = scmp.eq.s32.totalorder %s14, 1
    %p37 = por %p35, %p36
    %p39 = scmp.ne.s32.totalorder %s22, %s38
    %p40 = scmp.eq.s32.totalorder %s14, 0
    %p41 = por %p39, %p40
    %s43 = sadd.s32 %s42, 1
    %p46 = scmp.eq.s32.totalorder %s8, 1
    %p47 = scmp.ne.s32.totalorder %s42, %s44
    %p48 = scmp.eq.s32.totalorder %s8, 0
    %p49 = por %p47, %p48
    %p50 = scmp.ne.s32.totalorder %s42, %s44
    %p51 = scmp.eq.s32.totalorder %s13, 1
    %p52 = por %p50, %p51
    %p53 = scmp.ne.s32.totalorder %s44, %s45
    %p54 = scmp.eq.s32.totalorder %s13, 0
    %p55 = por %p53, %p54
    %p56 = scmp.ne.s32.totalorder %s44, %s45
    %p57 = scmp.eq.s32.totalorder %s14, 1
    %p58 = por %p56, %p57
    %p60 = scmp.ne.s32.totalorder %s45, %s59
    %p61 = scmp.eq.s32.totalorder %s14, 0
    %p62 = por %p60, %p61
    %s63 = ssub.s32 %s8, %s15
    %p64 = scmp.eq.s32.totalorder %s63, 0
    %s66 = sadd.s32 %s65, 1
    %s67 = scalar_select %p64, %s65, %s66
    %p70 = pneg %p64
    %p71 = scmp.eq.s32.totalorder %s8, 1
    %p72 = por %p70, %p71
    %p73 = scmp.ne.s32.totalorder %s65, %s68
    %p74 = scmp.eq.s32.totalorder %s8, 0
    %p75 = por %p73, %p74
    %p76 = scmp.ne.s32.totalorder %s65, %s68
    %p77 = scmp.eq.s32.totalorder %s13, 1
    %p78 = por %p76, %p77
    %p79 = scmp.ne.s32.totalorder %s68, %s69
    %p80 = scmp.eq.s32.totalorder %s13, 0
    %p81 = por %p79, %p80
    %p82 = scmp.ne.s32.totalorder %s68, %s69
    %p83 = scmp.eq.s32.totalorder %s14, 1
    %p84 = por %p82, %p83
    %p86 = scmp.ne.s32.totalorder %s69, %s85
    %p87 = scmp.eq.s32.totalorder %s14, 0
    %p88 = por %p86, %p87
    %p89 = scmp.le.s32.totalorder 1, %s8
    %p90 = scmp.lt.s32.totalorder %s8, 3
    %p91 = pnand %p89, %p90
    %p92 = pneg %p91
    // Predicated region
    $region9: #{vector_int.1} parent=5 // pred_check
      _
    $region10: #{vector_int.1} parent=5 // pred_check_branch
      %94 = sbr.rel (%p91) target = $region12
    $region11: #{vector_int.1} parent=5 // pred_region
      %s95 = ssub.s32 %s8, 1
      // Predicated region
      $region13: #{vector_int.1} parent=11 // pred_check
        %p96 = pneg %p55
      $region14: #{vector_int.1} parent=11 // pred_check_branch
        %98 = sbr.rel (%p96) target = $region16
      $region15: #{vector_int.1} parent=11 // pred_region
        _
      $region16: #{vector_int.1} parent=11 // pred_fallthru
        _
    $region12: #{vector_int.1} parent=5 // pred_fallthru
      _
    %p99 = scmp.lt.s32.totalorder %s8, 2
    // Predicated region
    $region17: #{vector_int.1} parent=5 // pred_check
      %p100 = pneg %p99
    $region18: #{vector_int.1} parent=5 // pred_check_branch
      %102 = sbr.rel (%p100) target = $region20
    $region19: #{vector_int.1} parent=5 // pred_region
      // Predicated region
      $region21: #{vector_int.1} parent=19 // pred_check
        %p103 = pneg %p28
      $region22: #{vector_int.1} parent=19 // pred_check_branch
        %105 = sbr.rel (%p103) target = $region24
      $region23: #{vector_int.1} parent=19 // pred_region
        %p106 = scmp.lt.s32.totalorder %s8, 1
        %s107 = scalar_select %p106, %s8, 1
        %s108 = smul.addr %s107, 4
        %s109 = smul.addr %s108, 4
        %s110 = scalar_lea.vmem %s0, %s109
      $region24: #{vector_int.1} parent=19 // pred_fallthru
        _
    $region20: #{vector_int.1} parent=5 // pred_fallthru
      _
    %p111 = scmp.le.s32.totalorder 1, %s8
    %p112 = scmp.lt.s32.totalorder %s8, 3
    %p113 = pnand %p111, %p112
    %p114 = pneg %p113
    // Predicated region
    $region25: #{vector_int.1} parent=5 // pred_check
      _
    $region26: #{vector_int.1} parent=5 // pred_check_branch
      %116 = sbr.rel (%p113) target = $region28
    $region27: #{vector_int.1} parent=5 // pred_region
      %s117 = ssub.s32 %s8, 1
      %p118 = scmp.lt.s32.totalorder %s13, 1
      %s119 = scalar_select %p118, %s13, 1
      %s120 = smul.addr %s119, 4
      %s121 = smul.addr %s120, 4
      %s122 = scalar_lea.vmem %s0, %s121
      %p123 = pneg %p34
      %p124 = pneg %p31
      %p125 = pneg %p55
      %p126 = pneg %p52
      %p127 = pneg %p81
      %p128 = pneg %p78
      %p129 = scmp.lt.s32.totalorder %s13, 1
      %s130 = scalar_select %p129, %s13, 1
      %s131 = smul.addr %s130, 4
      %s132 = smul.addr %s131, 4
      %s133 = scalar_lea.vmem %s2, %s132
      %p134 = scmp.lt.s32.totalorder %s13, 1
      %s135 = scalar_select %p134, %s13, 1
      %s136 = smul.addr %s135, 4
      %s137 = smul.addr %s136, 4
      %s138 = scalar_lea.vmem %s0, %s137
      %p139 = scmp.lt.s32.totalorder %s13, 1
      %s140 = scalar_select %p139, %s13, 1
      %s141 = smul.addr %s140, 4
      %s142 = smul.addr %s141, 4
      %s143 = scalar_lea.vmem %s2, %s142
      %v144 = vld [vmem:[%s138] sm:$0x77]
      %v145 = vld [vmem:[%s138 + $0x8] sm:$0x77]
      %v146 = vmul.f32 %v144, 0.0625
      %v147 = vmul.f32 %v145, 0.0625
      %148 = vst [vmem:[#allocation2] sm:$0x77] %v146
      %149 = vst [vmem:[#allocation2 + $0x8] sm:$0x77] %v147
      loop: start=0, step=1, limit=4
      $region29: #{vector_int.1} parent=27 // loop_pre_header
        _
      $region30: #{vector_int.1} parent=27 // loop_header
        %s151 = sphi 0, %s155
        %p152 = scmp.ge.s32.totalorder %s151, 4
      $region31: #{vector_int.1} parent=27 // loop_header_branch
        %154 = sbr.rel (%p152) target = $region35
      $region32: #{vector_int.1} parent=27 // loop_body
        %v156 = vld [vmem:[#allocation2] sm:$0x77]
        %v157 = vld [vmem:[#allocation2 + $0x8] sm:$0x77]
        %v161 = vunpack.c.l.s4 1966171168
        %v162 = vunpack.c.0.s8 %v161
        %v163 = vlaneseq
        %v164 = vshrl.u32 %v163, 7
        %v165 = vsub.s32 %v162, %v164
        %v166 = vrot.slane %v156, %v165
        %v168 = vunpack.c.l.s4 1966171168
        %v169 = vunpack.c.0.s8 %v168
        %v170 = vlaneseq
        %v171 = vshrl.u32 %v170, 7
        %v172 = vsub.s32 %v169, %v171
        %v173 = vrot.slane %v157, %v172
        %v174 = vcombine.low %v166, %v173
        %v176 = vunpack.c.l.s4 1966171168
        %v177 = vunpack.c.0.s8 %v176
        %v178 = vlaneseq
        %v179 = vshrl.u32 %v178, 7
        %v180 = vsub.s32 %v177, %v179
        %v181 = vrot.slane %v174, %v180
        %v183 = vlaneseq
        %vm184 = vcmp.ge.s32.totalorder %v183, 0
        %vm185 = vcmp.lt.s32.totalorder %v183, 512
        %vm186 = vmand %vm184, %vm185
        %187 = vst.msk [vmem:[#allocation3] ss:$8 sm:$0xf] %vm186, %v181
        %188 = vst.msk [vmem:[#allocation3] ss:$8 sm:$0x0] %vm186, %v181
        %v189 = vcombine.high %v166, %v173
        %v191 = vunpack.c.l.s4 1966171168
        %v192 = vunpack.c.0.s8 %v191
        %v193 = vlaneseq
        %v194 = vshrl.u32 %v193, 7
        %v195 = vsub.s32 %v192, %v194
        %v196 = vrot.slane %v189, %v195
        %s198 = scalar_lea.vmem [#allocation3], 1
        %199 = vst.msk [vmem:[%s198] ss:$8 sm:$0xf] %vm186, %v196
        %200 = vst.msk [vmem:[%s198] ss:$8 sm:$0x0] %vm186, %v196
        %v201 = vcombine.high %v181, %v181
        %s203 = scalar_lea.vmem [#allocation3], 2
        %204 = vst.msk [vmem:[%s203] ss:$8 sm:$0xf] %vm186, %v201
        %205 = vst.msk [vmem:[%s203] ss:$8 sm:$0x0] %vm186, %v201
        %v206 = vcombine.high %v156, %v156
        %v207 = vcombine.high %v157, %v157
        %210 = vrot.lane.b32.xlu0 %v156, 127
        %v211 = vpop.permute.xlu0 %210
        %212 = vrot.lane.b32.xlu0 %v206, 127
        %v213 = vpop.permute.xlu0 %212
        %214 = vrot.lane.b32.xlu0 %v157, 127
        %v215 = vpop.permute.xlu0 %214
        %216 = vrot.lane.b32.xlu0 %v207, 127
        %v217 = vpop.permute.xlu0 %216
        %v218 = vlaneseq
        %v219 = vand.u32 %v218, 127
        %vm220 = vcmp.lt.s32.totalorder %v219, 127
        %v221 = vsel %vm220, %v215, %v217
        %v222 = vsel %vm220, %v213, %v215
        %v223 = vsel %vm220, %v211, %v213
        %v224 = vsel %vm220, %v217, %v211
        %v229 = vcombine.low %v223, %v222
        %v230 = vcombine.low %v221, %v224
        %v232 = vunpack.c.l.s4 1966171168
        %v233 = vunpack.c.0.s8 %v232
        %v234 = vlaneseq
        %v235 = vshrl.u32 %v234, 7
        %v236 = vsub.s32 %v233, %v235
        %v237 = vrot.slane %v229, %v236
        %v239 = vunpack.c.l.s4 1966171168
        %v240 = vunpack.c.0.s8 %v239
        %v241 = vlaneseq
        %v242 = vshrl.u32 %v241, 7
        %v243 = vsub.s32 %v240, %v242
        %v244 = vrot.slane %v230, %v243
        %v245 = vcombine.low %v237, %v244
        %v247 = vunpack.c.l.s4 1966171168
        %v248 = vunpack.c.0.s8 %v247
        %v249 = vlaneseq
        %v250 = vshrl.u32 %v249, 7
        %v251 = vsub.s32 %v248, %v250
        %v252 = vrot.slane %v245, %v251
        %s254 = scalar_lea.vmem [#allocation3], 3
        %255 = vst.msk [vmem:[%s254] ss:$8 sm:$0xf] %vm186, %v252
        %256 = vst.msk [vmem:[%s254] ss:$8 sm:$0x0] %vm186, %v252
        %v257 = vcombine.high %v237, %v244
        %v259 = vunpack.c.l.s4 1966171168
        %v260 = vunpack.c.0.s8 %v259
        %v261 = vlaneseq
        %v262 = vshrl.u32 %v261, 7
        %v263 = vsub.s32 %v260, %v262
        %v264 = vrot.slane %v257, %v263
        %s266 = scalar_lea.vmem [#allocation3], 4
        %267 = vst.msk [vmem:[%s266] ss:$8 sm:$0xf] %vm186, %v264
        %268 = vst.msk [vmem:[%s266] ss:$8 sm:$0x0] %vm186, %v264
        %v269 = vcombine.high %v252, %v252
        %s271 = scalar_lea.vmem [#allocation3], 5
        %272 = vst.msk [vmem:[%s271] ss:$8 sm:$0xf] %vm186, %v269
        %273 = vst.msk [vmem:[%s271] ss:$8 sm:$0x0] %vm186, %v269
        %274 = vrot.lane.b32.xlu0 %v156, 120
        %v275 = vpop.permute.xlu0 %274
        %276 = vrot.lane.b32.xlu0 %v206, 120
        %v277 = vpop.permute.xlu0 %276
        %278 = vrot.lane.b32.xlu0 %v157, 120
        %v279 = vpop.permute.xlu0 %278
        %280 = vrot.lane.b32.xlu0 %v207, 120
        %v281 = vpop.permute.xlu0 %280
        %vm282 = vcmp.lt.s32.totalorder %v219, 120
        %v283 = vsel %vm282, %v279, %v281
        %v284 = vsel %vm282, %v277, %v279
        %v285 = vsel %vm282, %v275, %v277
        %v286 = vsel %vm282, %v281, %v275
        %v291 = vcombine.low %v285, %v284
        %v292 = vcombine.low %v283, %v286
        %v294 = vunpack.c.l.s4 1966171168
        %v295 = vunpack.c.0.s8 %v294
        %v296 = vlaneseq
        %v297 = vshrl.u32 %v296, 7
        %v298 = vsub.s32 %v295, %v297
        %v299 = vrot.slane %v291, %v298
        %v301 = vunpack.c.l.s4 1966171168
        %v302 = vunpack.c.0.s8 %v301
        %v303 = vlaneseq
        %v304 = vshrl.u32 %v303, 7
        %v305 = vsub.s32 %v302, %v304
        %v306 = vrot.slane %v292, %v305
        %v307 = vcombine.low %v299, %v306
        %v309 = vunpack.c.l.s4 1966171168
        %v310 = vunpack.c.0.s8 %v309
        %v311 = vlaneseq
        %v312 = vshrl.u32 %v311, 7
        %v313 = vsub.s32 %v310, %v312
        %v314 = vrot.slane %v307, %v313
        %s316 = scalar_lea.vmem [#allocation3], 6
        %317 = vst.msk [vmem:[%s316] ss:$8 sm:$0xf] %vm186, %v314
        %318 = vst.msk [vmem:[%s316] ss:$8 sm:$0x0] %vm186, %v314
        %v319 = vcombine.high %v299, %v306
        %v321 = vunpack.c.l.s4 1966171168
        %v322 = vunpack.c.0.s8 %v321
        %v323 = vlaneseq
        %v324 = vshrl.u32 %v323, 7
        %v325 = vsub.s32 %v322, %v324
        %v326 = vrot.slane %v319, %v325
        %s328 = scalar_lea.vmem [#allocation3], 7
        %329 = vst.msk [vmem:[%s328] ss:$8 sm:$0xf] %vm186, %v326
        %330 = vst.msk [vmem:[%s328] ss:$8 sm:$0x0] %vm186, %v326
        %v331 = vcombine.high %v314, %v314
        %s333 = scalar_lea.vmem [#allocation3], 32
        %334 = vst.msk [vmem:[%s333] ss:$8 sm:$0xf] %vm186, %v331
        %335 = vst.msk [vmem:[%s333] ss:$8 sm:$0x0] %vm186, %v331
        %336 = vrot.lane.b32.xlu0 %v156, 119
        %v337 = vpop.permute.xlu0 %336
        %338 = vrot.lane.b32.xlu0 %v206, 119
        %v339 = vpop.permute.xlu0 %338
        %340 = vrot.lane.b32.xlu0 %v157, 119
        %v341 = vpop.permute.xlu0 %340
        %342 = vrot.lane.b32.xlu0 %v207, 119
        %v343 = vpop.permute.xlu0 %342
        %vm344 = vcmp.lt.s32.totalorder %v219, 119
        %v345 = vsel %vm344, %v341, %v343
        %v346 = vsel %vm344, %v339, %v341
        %v347 = vsel %vm344, %v337, %v339
        %v348 = vsel %vm344, %v343, %v337
        %v353 = vcombine.low %v347, %v346
        %v354 = vcombine.low %v345, %v348
        %v356 = vunpack.c.l.s4 1966171168
        %v357 = vunpack.c.0.s8 %v356
        %v358 = vlaneseq
        %v359 = vshrl.u32 %v358, 7
        %v360 = vsub.s32 %v357, %v359
        %v361 = vrot.slane %v353, %v360
        %v363 = vunpack.c.l.s4 1966171168
        %v364 = vunpack.c.0.s8 %v363
        %v365 = vlaneseq
        %v366 = vshrl.u32 %v365, 7
        %v367 = vsub.s32 %v364, %v366
        %v368 = vrot.slane %v354, %v367
        %v369 = vcombine.low %v361, %v368
        %v371 = vunpack.c.l.s4 1966171168
        %v372 = vunpack.c.0.s8 %v371
        %v373 = vlaneseq
        %v374 = vshrl.u32 %v373, 7
        %v375 = vsub.s32 %v372, %v374
        %v376 = vrot.slane %v369, %v375
        %s378 = scalar_lea.vmem [#allocation3], 33
        %379 = vst.msk [vmem:[%s378] ss:$8 sm:$0xf] %vm186, %v376
        %380 = vst.msk [vmem:[%s378] ss:$8 sm:$0x0] %vm186, %v376
        %v381 = vcombine.high %v361, %v368
        %v383 = vunpack.c.l.s4 1966171168
        %v384 = vunpack.c.0.s8 %v383
        %v385 = vlaneseq
        %v386 = vshrl.u32 %v385, 7
        %v387 = vsub.s32 %v384, %v386
        %v388 = vrot.slane %v381, %v387
        %s390 = scalar_lea.vmem [#allocation3], 34
        %391 = vst.msk [vmem:[%s390] ss:$8 sm:$0xf] %vm186, %v388
        %392 = vst.msk [vmem:[%s390] ss:$8 sm:$0x0] %vm186, %v388
        %v393 = vcombine.high %v376, %v376
        %s395 = scalar_lea.vmem [#allocation3], 35
        %396 = vst.msk [vmem:[%s395] ss:$8 sm:$0xf] %vm186, %v393
        %397 = vst.msk [vmem:[%s395] ss:$8 sm:$0x0] %vm186, %v393
        %398 = vrot.lane.b32.xlu0 %v156, 64
        %v399 = vpop.permute.xlu0 %398
        %400 = vrot.lane.b32.xlu0 %v206, 64
        %v401 = vpop.permute.xlu0 %400
        %402 = vrot.lane.b32.xlu0 %v157, 64
        %v403 = vpop.permute.xlu0 %402
        %404 = vrot.lane.b32.xlu0 %v207, 64
        %v405 = vpop.permute.xlu0 %404
        %vm406 = vcmp.lt.s32.totalorder %v219, 64
        %v407 = vsel %vm406, %v403, %v405
        %v408 = vsel %vm406, %v401, %v403
        %v409 = vsel %vm406, %v399, %v401
        %v410 = vsel %vm406, %v405, %v399
        %v415 = vcombine.low %v409, %v408
        %v416 = vcombine.low %v407, %v410
        %v418 = vunpack.c.l.s4 1966171168
        %v419 = vunpack.c.0.s8 %v418
        %v420 = vlaneseq
        %v421 = vshrl.u32 %v420, 7
        %v422 = vsub.s32 %v419, %v421
        %v423 = vrot.slane %v415, %v422
        %v425 = vunpack.c.l.s4 1966171168
        %v426 = vunpack.c.0.s8 %v425
        %v427 = vlaneseq
        %v428 = vshrl.u32 %v427, 7
        %v429 = vsub.s32 %v426, %v428
        %v430 = vrot.slane %v416, %v429
        %v431 = vcombine.low %v423, %v430
        %v433 = vunpack.c.l.s4 1966171168
        %v434 = vunpack.c.0.s8 %v433
        %v435 = vlaneseq
        %v436 = vshrl.u32 %v435, 7
        %v437 = vsub.s32 %v434, %v436
        %v438 = vrot.slane %v431, %v437
        %s440 = scalar_lea.vmem [#allocation3], 36
        %441 = vst.msk [vmem:[%s440] ss:$8 sm:$0xf] %vm186, %v438
        %442 = vst.msk [vmem:[%s440] ss:$8 sm:$0x0] %vm186, %v438
        %v443 = vcombine.high %v423, %v430
        %v445 = vunpack.c.l.s4 1966171168
        %v446 = vunpack.c.0.s8 %v445
        %v447 = vlaneseq
        %v448 = vshrl.u32 %v447, 7
        %v449 = vsub.s32 %v446, %v448
        %v450 = vrot.slane %v443, %v449
        %s452 = scalar_lea.vmem [#allocation3], 37
        %453 = vst.msk [vmem:[%s452] ss:$8 sm:$0xf] %vm186, %v450
        %454 = vst.msk [vmem:[%s452] ss:$8 sm:$0x0] %vm186, %v450
        %v455 = vcombine.high %v438, %v438
        %s457 = scalar_lea.vmem [#allocation3], 38
        %458 = vst.msk [vmem:[%s457] ss:$8 sm:$0xf] %vm186, %v455
        %459 = vst.msk [vmem:[%s457] ss:$8 sm:$0x0] %vm186, %v455
        %460 = vrot.lane.b32.xlu0 %v156, 63
        %v461 = vpop.permute.xlu0 %460
        %462 = vrot.lane.b32.xlu0 %v206, 63
        %v463 = vpop.permute.xlu0 %462
        %464 = vrot.lane.b32.xlu0 %v157, 63
        %v465 = vpop.permute.xlu0 %464
        %466 = vrot.lane.b32.xlu0 %v207, 63
        %v467 = vpop.permute.xlu0 %466
        %vm468 = vcmp.lt.s32.totalorder %v219, 63
        %v469 = vsel %vm468, %v465, %v467
        %v470 = vsel %vm468, %v463, %v465
        %v471 = vsel %vm468, %v461, %v463
        %v472 = vsel %vm468, %v467, %v461
        %v477 = vcombine.low %v471, %v470
        %v478 = vcombine.low %v469, %v472
        %v480 = vunpack.c.l.s4 1966171168
        %v481 = vunpack.c.0.s8 %v480
        %v482 = vlaneseq
        %v483 = vshrl.u32 %v482, 7
        %v484 = vsub.s32 %v481, %v483
        %v485 = vrot.slane %v477, %v484
        %v487 = vunpack.c.l.s4 1966171168
        %v488 = vunpack.c.0.s8 %v487
        %v489 = vlaneseq
        %v490 = vshrl.u32 %v489, 7
        %v491 = vsub.s32 %v488, %v490
        %v492 = vrot.slane %v478, %v491
        %v493 = vcombine.low %v485, %v492
        %v495 = vunpack.c.l.s4 1966171168
        %v496 = vunpack.c.0.s8 %v495
        %v497 = vlaneseq
        %v498 = vshrl.u32 %v497, 7
        %v499 = vsub.s32 %v496, %v498
        %v500 = vrot.slane %v493, %v499
        %s502 = scalar_lea.vmem [#allocation3], 39
        %503 = vst.msk [vmem:[%s502] ss:$8 sm:$0xf] %vm186, %v500
        %504 = vst.msk [vmem:[%s502] ss:$8 sm:$0x0] %vm186, %v500
        %v505 = vcombine.high %v485, %v492
        %v507 = vunpack.c.l.s4 1966171168
        %v508 = vunpack.c.0.s8 %v507
        %v509 = vlaneseq
        %v510 = vshrl.u32 %v509, 7
        %v511 = vsub.s32 %v508, %v510
        %v512 = vrot.slane %v505, %v511
        %s514 = scalar_lea.vmem [#allocation3], 64
        %515 = vst.msk [vmem:[%s514] ss:$8 sm:$0xf] %vm186, %v512
        %516 = vst.msk [vmem:[%s514] ss:$8 sm:$0x0] %vm186, %v512
        %v517 = vcombine.high %v500, %v500
        %s519 = scalar_lea.vmem [#allocation3], 65
        %520 = vst.msk [vmem:[%s519] ss:$8 sm:$0xf] %vm186, %v517
        %521 = vst.msk [vmem:[%s519] ss:$8 sm:$0x0] %vm186, %v517
        %522 = vrot.lane.b32.xlu0 %v156, 56
        %v523 = vpop.permute.xlu0 %522
        %524 = vrot.lane.b32.xlu0 %v206, 56
        %v525 = vpop.permute.xlu0 %524
        %526 = vrot.lane.b32.xlu0 %v157, 56
        %v527 = vpop.permute.xlu0 %526
        %528 = vrot.lane.b32.xlu0 %v207, 56
        %v529 = vpop.permute.xlu0 %528
        %vm530 = vcmp.lt.s32.totalorder %v219, 56
        %v531 = vsel %vm530, %v527, %v529
        %v532 = vsel %vm530, %v525, %v527
        %v533 = vsel %vm530, %v523, %v525
        %v534 = vsel %vm530, %v529, %v523
        %v539 = vcombine.low %v533, %v532
        %v540 = vcombine.low %v531, %v534
        %v542 = vunpack.c.l.s4 1966171168
        %v543 = vunpack.c.0.s8 %v542
        %v544 = vlaneseq
        %v545 = vshrl.u32 %v544, 7
        %v546 = vsub.s32 %v543, %v545
        %v547 = vrot.slane %v539, %v546
        %v549 = vunpack.c.l.s4 1966171168
        %v550 = vunpack.c.0.s8 %v549
        %v551 = vlaneseq
        %v552 = vshrl.u32 %v551, 7
        %v553 = vsub.s32 %v550, %v552
        %v554 = vrot.slane %v540, %v553
        %v555 = vcombine.low %v547, %v554
        %v557 = vunpack.c.l.s4 1966171168
        %v558 = vunpack.c.0.s8 %v557
        %v559 = vlaneseq
        %v560 = vshrl.u32 %v559, 7
        %v561 = vsub.s32 %v558, %v560
        %v562 = vrot.slane %v555, %v561
        %s564 = scalar_lea.vmem [#allocation3], 66
        %565 = vst.msk [vmem:[%s564] ss:$8 sm:$0xf] %vm186, %v562
        %566 = vst.msk [vmem:[%s564] ss:$8 sm:$0x0] %vm186, %v562
        %v567 = vcombine.high %v547, %v554
        %v569 = vunpack.c.l.s4 1966171168
        %v570 = vunpack.c.0.s8 %v569
        %v571 = vlaneseq
        %v572 = vshrl.u32 %v571, 7
        %v573 = vsub.s32 %v570, %v572
        %v574 = vrot.slane %v567, %v573
        %s576 = scalar_lea.vmem [#allocation3], 67
        %577 = vst.msk [vmem:[%s576] ss:$8 sm:$0xf] %vm186, %v574
        %578 = vst.msk [vmem:[%s576] ss:$8 sm:$0x0] %vm186, %v574
        %v579 = vcombine.high %v562, %v562
        %s581 = scalar_lea.vmem [#allocation3], 68
        %582 = vst.msk [vmem:[%s581] ss:$8 sm:$0xf] %vm186, %v579
        %583 = vst.msk [vmem:[%s581] ss:$8 sm:$0x0] %vm186, %v579
        %584 = vrot.lane.b32.xlu0 %v156, 55
        %v585 = vpop.permute.xlu0 %584
        %586 = vrot.lane.b32.xlu0 %v206, 55
        %v587 = vpop.permute.xlu0 %586
        %588 = vrot.lane.b32.xlu0 %v157, 55
        %v589 = vpop.permute.xlu0 %588
        %590 = vrot.lane.b32.xlu0 %v207, 55
        %v591 = vpop.permute.xlu0 %590
        %vm592 = vcmp.lt.s32.totalorder %v219, 55
        %v593 = vsel %vm592, %v589, %v591
        %v594 = vsel %vm592, %v587, %v589
        %v595 = vsel %vm592, %v585, %v587
        %v596 = vsel %vm592, %v591, %v585
        %v601 = vcombine.low %v595, %v594
        %v602 = vcombine.low %v593, %v596
        %v604 = vunpack.c.l.s4 1966171168
        %v605 = vunpack.c.0.s8 %v604
        %v606 = vlaneseq
        %v607 = vshrl.u32 %v606, 7
        %v608 = vsub.s32 %v605, %v607
        %v609 = vrot.slane %v601, %v608
        %v611 = vunpack.c.l.s4 1966171168
        %v612 = vunpack.c.0.s8 %v611
        %v613 = vlaneseq
        %v614 = vshrl.u32 %v613, 7
        %v615 = vsub.s32 %v612, %v614
        %v616 = vrot.slane %v602, %v615
        %v617 = vcombine.low %v609, %v616
        %v619 = vunpack.c.l.s4 1966171168
        %v620 = vunpack.c.0.s8 %v619
        %v621 = vlaneseq
        %v622 = vshrl.u32 %v621, 7
        %v623 = vsub.s32 %v620, %v622
        %v624 = vrot.slane %v617, %v623
        %s626 = scalar_lea.vmem [#allocation3], 69
        %627 = vst.msk [vmem:[%s626] ss:$8 sm:$0xf] %vm186, %v624
        %628 = vst.msk [vmem:[%s626] ss:$8 sm:$0x0] %vm186, %v624
        %v629 = vcombine.high %v609, %v616
        %v631 = vunpack.c.l.s4 1966171168
        %v632 = vunpack.c.0.s8 %v631
        %v633 = vlaneseq
        %v634 = vshrl.u32 %v633, 7
        %v635 = vsub.s32 %v632, %v634
        %v636 = vrot.slane %v629, %v635
        %s638 = scalar_lea.vmem [#allocation3], 70
        %639 = vst.msk [vmem:[%s638] ss:$8 sm:$0xf] %vm186, %v636
        %640 = vst.msk [vmem:[%s638] ss:$8 sm:$0x0] %vm186, %v636
        %v641 = vcombine.high %v624, %v624
        %s643 = scalar_lea.vmem [#allocation3], 71
        %644 = vst.msk [vmem:[%s643] ss:$8 sm:$0xf] %vm186, %v641
        %645 = vst.msk [vmem:[%s643] ss:$8 sm:$0x0] %vm186, %v641
        %v646 = vld [vmem:[#allocation2] sm:$0x77]
        %v647 = vld [vmem:[#allocation2 + $0x8] sm:$0x77]
        %v648 = vld [vmem:[%s1] sm:$0x77]
        %v649 = vld [vmem:[%s1 + $0x8] sm:$0x77]
        %v650 = vadd.f32 %v646, %v648
        %v651 = vadd.f32 %v647, %v649
        %v652 = vfloor.f32 %v650
        %v653 = vfloor.f32 %v651
        %v654 = vsub.f32 %v650, %v652
        %v655 = vsub.f32 %v651, %v653
        %v656 = vcvt.f32.s32.to.zero.pseudo %v652
        %v657 = vcvt.f32.s32.to.zero.pseudo %v653
        %vm658 = vcmp.ge.s32.totalorder %v656, 0
        %vm659 = vcmp.ge.s32.totalorder %v657, 0
        %vm660 = vcmp.lt.s32.totalorder %v656, 8
        %vm661 = vcmp.lt.s32.totalorder %v657, 8
        %vm662 = vmand %vm658, %vm660
        %vm663 = vmand %vm659, %vm661
        %v664 = vsub.f32 1.0, %v654
        %v665 = vsub.f32 1.0, %v655
        %v666 = vsel %vm662, %v664, 0.0
        %v667 = vsel %vm663, %v665, 0.0
        %vm668 = vcmp.ge.s32.totalorder %v656, 4294967295
        %vm669 = vcmp.ge.s32.totalorder %v657, 4294967295
        %vm670 = vcmp.lt.s32.totalorder %v656, 7
        %vm671 = vcmp.lt.s32.totalorder %v657, 7
        %vm672 = vmand %vm668, %vm670
        %vm673 = vmand %vm669, %vm671
        %v674 = vsel %vm672, %v654, 0.0
        %v675 = vsel %vm673, %v655, 0.0
        %v676 = vmul.u32 %v656, 64
        %v677 = vmul.u32 %v657, 64
        %v678 = vmul.u32 %v656, 8
        %v679 = vmul.u32 %v657, 8
        %v680 = vrot.slane %v678, 5
        %v681 = vrot.slane %v680, 4
        %v682 = vrot.slane %v679, 5
        %v683 = vrot.slane %v682, 4
        %v684 = vadd.s32 %v676, %v681
        %v685 = vadd.s32 %v677, %v683
        %v686 = vrot.slane %v656, 6
        %v687 = vrot.slane %v686, 4
        %v688 = vrot.slane %v657, 6
        %v689 = vrot.slane %v688, 4
        %v690 = vadd.s32 %v684, %v687
        %v691 = vadd.s32 %v685, %v689
        %vm692 = vcmp.lt.s32.totalorder %v690, 0
        %vm693 = vcmp.lt.s32.totalorder %v691, 0
        %v694 = vadd.s32 %v690, 512
        %v695 = vadd.s32 %v691, 512
        %v696 = vsel %vm692, %v694, %v690
        %v697 = vsel %vm693, %v695, %v691
        %v698 = vlaneseq
        %v699 = vshrl.u32 %v698, 7
        %v700 = vadd.s32 %v699, 8
        %v701 = vadd.s32 %v699, 16
        %v702 = vadd.s32 %v699, 24
        %v703 = vadd.s32 %v699, 32
        %v704 = vadd.s32 %v699, 40
        %v705 = vadd.s32 %v699, 48
        %v706 = vadd.s32 %v699, 56
        %v707 = vadd.s32 %v699, 64
        %v708 = vadd.s32 %v699, 72
        %v709 = vadd.s32 %v699, 80
        %v710 = vadd.s32 %v699, 88
        %v711 = vadd.s32 %v699, 96
        %v712 = vadd.s32 %v699, 104
        %v713 = vadd.s32 %v699, 112
        %v714 = vadd.s32 %v699, 120
        %v715 = vadd.s32 %v699, 128
        %v716 = vadd.s32 %v699, 136
        %v717 = vadd.s32 %v699, 144
        %v718 = vadd.s32 %v699, 152
        %v719 = vadd.s32 %v699, 160
        %v720 = vadd.s32 %v699, 168
        %v721 = vadd.s32 %v699, 176
        %v722 = vadd.s32 %v699, 184
        %v723 = vadd.s32 %v699, 192
        %v724 = vadd.s32 %v699, 200
        %v725 = vadd.s32 %v699, 208
        %v726 = vadd.s32 %v699, 216
        %v727 = vadd.s32 %v699, 224
        %v728 = vadd.s32 %v699, 232
        %v729 = vadd.s32 %v699, 240
        %v730 = vadd.s32 %v699, 248
        %v731 = vadd.s32 %v699, 256
        %v732 = vadd.s32 %v699, 264
        %v733 = vadd.s32 %v699, 272
        %v734 = vadd.s32 %v699, 280
        %v735 = vadd.s32 %v699, 288
        %v736 = vadd.s32 %v699, 296
        %v737 = vadd.s32 %v699, 304
        %v738 = vadd.s32 %v699, 312
        %v739 = vadd.s32 %v699, 320
        %v740 = vadd.s32 %v699, 328
        %v741 = vadd.s32 %v699, 336
        %v742 = vadd.s32 %v699, 344
        %v743 = vadd.s32 %v699, 352
        %v744 = vadd.s32 %v699, 360
        %v745 = vadd.s32 %v699, 368
        %v746 = vadd.s32 %v699, 376
        %v747 = vadd.s32 %v699, 384
        %v748 = vadd.s32 %v699, 392
        %v749 = vadd.s32 %v699, 400
        %v750 = vadd.s32 %v699, 408
        %v751 = vadd.s32 %v699, 416
        %v752 = vadd.s32 %v699, 424
        %v753 = vadd.s32 %v699, 432
        %v754 = vadd.s32 %v699, 440
        %v755 = vadd.s32 %v699, 448
        %v756 = vadd.s32 %v699, 456
        %v757 = vadd.s32 %v699, 464
        %v758 = vadd.s32 %v699, 472
        %v759 = vadd.s32 %v699, 480
        %v760 = vadd.s32 %v699, 488
        %v761 = vadd.s32 %v699, 496
        %v762 = vadd.s32 %v699, 504
        %v763 = vlaneseq
        %v764 = vshrl.u32 %v763, 7
        %v765 = vsub.s32 0, %v764
        %v766 = vrot.slane %v696, %v765
        %v767 = vlaneseq
        %v768 = vshrl.u32 %v767, 7
        %v769 = vsub.s32 4, %v768
        %v770 = vrot.slane %v696, %v769
        %v771 = vlaneseq
        %v772 = vshrl.u32 %v771, 7
        %v773 = vsub.s32 0, %v772
        %v774 = vrot.slane %v697, %v773
        %v775 = vlaneseq
        %v776 = vshrl.u32 %v775, 7
        %v777 = vsub.s32 4, %v776
        %v778 = vrot.slane %v697, %v777
        %v779 = vlaneseq
        %v780 = vshrl.u32 %v779, 7
        %v781 = vsub.s32 0, %v780
        %v782 = vrot.slane %v766, %v781
        %v783 = vlaneseq
        %v784 = vshrl.u32 %v783, 7
        %v785 = vsub.s32 0, %v784
        %v786 = vrot.slane %v770, %v785
        %v787 = vlaneseq
        %v788 = vshrl.u32 %v787, 7
        %v789 = vsub.s32 0, %v788
        %v790 = vrot.slane %v774, %v789
        %v791 = vlaneseq
        %v792 = vshrl.u32 %v791, 7
        %v793 = vsub.s32 0, %v792
        %v794 = vrot.slane %v778, %v793
        %vm795 = vcmp.eq.s32.totalorder %v699, %v782
        %vm796 = vcmp.eq.s32.totalorder %v699, %v786
        %vm797 = vcmp.eq.s32.totalorder %v699, %v790
        %vm798 = vcmp.eq.s32.totalorder %v699, %v794
        %vm799 = vcmp.eq.s32.totalorder %v700, %v782
        %vm800 = vcmp.eq.s32.totalorder %v700, %v786
        %vm801 = vcmp.eq.s32.totalorder %v700, %v790
        %vm802 = vcmp.eq.s32.totalorder %v700, %v794
        %vm803 = vcmp.eq.s32.totalorder %v701, %v782
        %vm804 = vcmp.eq.s32.totalorder %v701, %v786
        %vm805 = vcmp.eq.s32.totalorder %v701, %v790
        %vm806 = vcmp.eq.s32.totalorder %v701, %v794
        %vm807 = vcmp.eq.s32.totalorder %v702, %v782
        %vm808 = vcmp.eq.s32.totalorder %v702, %v786
        %vm809 = vcmp.eq.s32.totalorder %v702, %v790
        %vm810 = vcmp.eq.s32.totalorder %v702, %v794
        %vm811 = vcmp.eq.s32.totalorder %v703, %v782
        %vm812 = vcmp.eq.s32.totalorder %v703, %v786
        %vm813 = vcmp.eq.s32.totalorder %v703, %v790
        %vm814 = vcmp.eq.s32.totalorder %v703, %v794
        %vm815 = vcmp.eq.s32.totalorder %v704, %v782
        %vm816 = vcmp.eq.s32.totalorder %v704, %v786
        %vm817 = vcmp.eq.s32.totalorder %v704, %v790
        %vm818 = vcmp.eq.s32.totalorder %v704, %v794
        %vm819 = vcmp.eq.s32.totalorder %v705, %v782
        %vm820 = vcmp.eq.s32.totalorder %v705, %v786
        %vm821 = vcmp.eq.s32.totalorder %v705, %v790
        %vm822 = vcmp.eq.s32.totalorder %v705, %v794
        %vm823 = vcmp.eq.s32.totalorder %v706, %v782
        %vm824 = vcmp.eq.s32.totalorder %v706, %v786
        %vm825 = vcmp.eq.s32.totalorder %v706, %v790
        %vm826 = vcmp.eq.s32.totalorder %v706, %v794
        %vm827 = vcmp.eq.s32.totalorder %v707, %v782
        %vm828 = vcmp.eq.s32.totalorder %v707, %v786
        %vm829 = vcmp.eq.s32.totalorder %v707, %v790
        %vm830 = vcmp.eq.s32.totalorder %v707, %v794
        %vm831 = vcmp.eq.s32.totalorder %v708, %v782
        %vm832 = vcmp.eq.s32.totalorder %v708, %v786
        %vm833 = vcmp.eq.s32.totalorder %v708, %v790
        %vm834 = vcmp.eq.s32.totalorder %v708, %v794
        %vm835 = vcmp.eq.s32.totalorder %v709, %v782
        %vm836 = vcmp.eq.s32.totalorder %v709, %v786
        %vm837 = vcmp.eq.s32.totalorder %v709, %v790
        %vm838 = vcmp.eq.s32.totalorder %v709, %v794
        %vm839 = vcmp.eq.s32.totalorder %v710, %v782
        %vm840 = vcmp.eq.s32.totalorder %v710, %v786
        %vm841 = vcmp.eq.s32.totalorder %v710, %v790
        %vm842 = vcmp.eq.s32.totalorder %v710, %v794
        %vm843 = vcmp.eq.s32.totalorder %v711, %v782
        %vm844 = vcmp.eq.s32.totalorder %v711, %v786
        %vm845 = vcmp.eq.s32.totalorder %v711, %v790
        %vm846 = vcmp.eq.s32.totalorder %v711, %v794
        %vm847 = vcmp.eq.s32.totalorder %v712, %v782
        %vm848 = vcmp.eq.s32.totalorder %v712, %v786
        %vm849 = vcmp.eq.s32.totalorder %v712, %v790
        %vm850 = vcmp.eq.s32.totalorder %v712, %v794
        %vm851 = vcmp.eq.s32.totalorder %v713, %v782
        %vm852 = vcmp.eq.s32.totalorder %v713, %v786
        %vm853 = vcmp.eq.s32.totalorder %v713, %v790
        %vm854 = vcmp.eq.s32.totalorder %v713, %v794
        %vm855 = vcmp.eq.s32.totalorder %v714, %v782
        %vm856 = vcmp.eq.s32.totalorder %v714, %v786
        %vm857 = vcmp.eq.s32.totalorder %v714, %v790
        %vm858 = vcmp.eq.s32.totalorder %v714, %v794
        %vm859 = vcmp.eq.s32.totalorder %v715, %v782
        %vm860 = vcmp.eq.s32.totalorder %v715, %v786
        %vm861 = vcmp.eq.s32.totalorder %v715, %v790
        %vm862 = vcmp.eq.s32.totalorder %v715, %v794
        %vm863 = vcmp.eq.s32.totalorder %v716, %v782
        %vm864 = vcmp.eq.s32.totalorder %v716, %v786
        %vm865 = vcmp.eq.s32.totalorder %v716, %v790
        %vm866 = vcmp.eq.s32.totalorder %v716, %v794
        %vm867 = vcmp.eq.s32.totalorder %v717, %v782
        %vm868 = vcmp.eq.s32.totalorder %v717, %v786
        %vm869 = vcmp.eq.s32.totalorder %v717, %v790
        %vm870 = vcmp.eq.s32.totalorder %v717, %v794
        %vm871 = vcmp.eq.s32.totalorder %v718, %v782
        %vm872 = vcmp.eq.s32.totalorder %v718, %v786
        %vm873 = vcmp.eq.s32.totalorder %v718, %v790
        %vm874 = vcmp.eq.s32.totalorder %v718, %v794
        %vm875 = vcmp.eq.s32.totalorder %v719, %v782
        %vm876 = vcmp.eq.s32.totalorder %v719, %v786
        %vm877 = vcmp.eq.s32.totalorder %v719, %v790
        %vm878 = vcmp.eq.s32.totalorder %v719, %v794
        %vm879 = vcmp.eq.s32.totalorder %v720, %v782
        %vm880 = vcmp.eq.s32.totalorder %v720, %v786
        %vm881 = vcmp.eq.s32.totalorder %v720, %v790
        %vm882 = vcmp.eq.s32.totalorder %v720, %v794
        %vm883 = vcmp.eq.s32.totalorder %v721, %v782
        %vm884 = vcmp.eq.s32.totalorder %v721, %v786
        %vm885 = vcmp.eq.s32.totalorder %v721, %v790
        %vm886 = vcmp.eq.s32.totalorder %v721, %v794
        %vm887 = vcmp.eq.s32.totalorder %v722, %v782
        %vm888 = vcmp.eq.s32.totalorder %v722, %v786
        %vm889 = vcmp.eq.s32.totalorder %v722, %v790
        %vm890 = vcmp.eq.s32.totalorder %v722, %v794
        %vm891 = vcmp.eq.s32.totalorder %v723, %v782
        %vm892 = vcmp.eq.s32.totalorder %v723, %v786
        %vm893 = vcmp.eq.s32.totalorder %v723, %v790
        %vm894 = vcmp.eq.s32.totalorder %v723, %v794
        %vm895 = vcmp.eq.s32.totalorder %v724, %v782
        %vm896 = vcmp.eq.s32.totalorder %v724, %v786
        %vm897 = vcmp.eq.s32.totalorder %v724, %v790
        %vm898 = vcmp.eq.s32.totalorder %v724, %v794
        %vm899 = vcmp.eq.s32.totalorder %v725, %v782
        %vm900 = vcmp.eq.s32.totalorder %v725, %v786
        %vm901 = vcmp.eq.s32.totalorder %v725, %v790
        %vm902 = vcmp.eq.s32.totalorder %v725, %v794
        %vm903 = vcmp.eq.s32.totalorder %v726, %v782
        %vm904 = vcmp.eq.s32.totalorder %v726, %v786
        %vm905 = vcmp.eq.s32.totalorder %v726, %v790
        %vm906 = vcmp.eq.s32.totalorder %v726, %v794
        %vm907 = vcmp.eq.s32.totalorder %v727, %v782
        %vm908 = vcmp.eq.s32.totalorder %v727, %v786
        %vm909 = vcmp.eq.s32.totalorder %v727, %v790
        %vm910 = vcmp.eq.s32.totalorder %v727, %v794
        %vm911 = vcmp.eq.s32.totalorder %v728, %v782
        %vm912 = vcmp.eq.s32.totalorder %v728, %v786
        %vm913 = vcmp.eq.s32.totalorder %v728, %v790
        %vm914 = vcmp.eq.s32.totalorder %v728, %v794
        %vm915 = vcmp.eq.s32.totalorder %v729, %v782
        %vm916 = vcmp.eq.s32.totalorder %v729, %v786
        %vm917 = vcmp.eq.s32.totalorder %v729, %v790
        %vm918 = vcmp.eq.s32.totalorder %v729, %v794
        %vm919 = vcmp.eq.s32.totalorder %v730, %v782
        %vm920 = vcmp.eq.s32.totalorder %v730, %v786
        %vm921 = vcmp.eq.s32.totalorder %v730, %v790
        %vm922 = vcmp.eq.s32.totalorder %v730, %v794
        %vm923 = vcmp.eq.s32.totalorder %v731, %v782
        %vm924 = vcmp.eq.s32.totalorder %v731, %v786
        %vm925 = vcmp.eq.s32.totalorder %v731, %v790
        %vm926 = vcmp.eq.s32.totalorder %v731, %v794
        %vm927 = vcmp.eq.s32.totalorder %v732, %v782
        %vm928 = vcmp.eq.s32.totalorder %v732, %v786
        %vm929 = vcmp.eq.s32.totalorder %v732, %v790
        %vm930 = vcmp.eq.s32.totalorder %v732, %v794
        %vm931 = vcmp.eq.s32.totalorder %v733, %v782
        %vm932 = vcmp.eq.s32.totalorder %v733, %v786
        %vm933 = vcmp.eq.s32.totalorder %v733, %v790
        %vm934 = vcmp.eq.s32.totalorder %v733, %v794
        %vm935 = vcmp.eq.s32.totalorder %v734, %v782
        %vm936 = vcmp.eq.s32.totalorder %v734, %v786
        %vm937 = vcmp.eq.s32.totalorder %v734, %v790
        %vm938 = vcmp.eq.s32.totalorder %v734, %v794
        %vm939 = vcmp.eq.s32.totalorder %v735, %v782
        %vm940 = vcmp.eq.s32.totalorder %v735, %v786
        %vm941 = vcmp.eq.s32.totalorder %v735, %v790
        %vm942 = vcmp.eq.s32.totalorder %v735, %v794
        %vm943 = vcmp.eq.s32.totalorder %v736, %v782
        %vm944 = vcmp.eq.s32.totalorder %v736, %v786
        %vm945 = vcmp.eq.s32.totalorder %v736, %v790
        %vm946 = vcmp.eq.s32.totalorder %v736, %v794
        %vm947 = vcmp.eq.s32.totalorder %v737, %v782
        %vm948 = vcmp.eq.s32.totalorder %v737, %v786
        %vm949 = vcmp.eq.s32.totalorder %v737, %v790
        %vm950 = vcmp.eq.s32.totalorder %v737, %v794
        %vm951 = vcmp.eq.s32.totalorder %v738, %v782
        %vm952 = vcmp.eq.s32.totalorder %v738, %v786
        %vm953 = vcmp.eq.s32.totalorder %v738, %v790
        %vm954 = vcmp.eq.s32.totalorder %v738, %v794
        %vm955 = vcmp.eq.s32.totalorder %v739, %v782
        %vm956 = vcmp.eq.s32.totalorder %v739, %v786
        %vm957 = vcmp.eq.s32.totalorder %v739, %v790
        %vm958 = vcmp.eq.s32.totalorder %v739, %v794
        %vm959 = vcmp.eq.s32.totalorder %v740, %v782
        %vm960 = vcmp.eq.s32.totalorder %v740, %v786
        %vm961 = vcmp.eq.s32.totalorder %v740, %v790
        %vm962 = vcmp.eq.s32.totalorder %v740, %v794
        %vm963 = vcmp.eq.s32.totalorder %v741, %v782
        %vm964 = vcmp.eq.s32.totalorder %v741, %v786
        %vm965 = vcmp.eq.s32.totalorder %v741, %v790
        %vm966 = vcmp.eq.s32.totalorder %v741, %v794
        %vm967 = vcmp.eq.s32.totalorder %v742, %v782
        %vm968 = vcmp.eq.s32.totalorder %v742, %v786
        %vm969 = vcmp.eq.s32.totalorder %v742, %v790
        %vm970 = vcmp.eq.s32.totalorder %v742, %v794
        %vm971 = vcmp.eq.s32.totalorder %v743, %v782
        %vm972 = vcmp.eq.s32.totalorder %v743, %v786
        %vm973 = vcmp.eq.s32.totalorder %v743, %v790
        %vm974 = vcmp.eq.s32.totalorder %v743, %v794
        %vm975 = vcmp.eq.s32.totalorder %v744, %v782
        %vm976 = vcmp.eq.s32.totalorder %v744, %v786
        %vm977 = vcmp.eq.s32.totalorder %v744, %v790
        %vm978 = vcmp.eq.s32.totalorder %v744, %v794
        %vm979 = vcmp.eq.s32.totalorder %v745, %v782
        %vm980 = vcmp.eq.s32.totalorder %v745, %v786
        %vm981 = vcmp.eq.s32.totalorder %v745, %v790
        %vm982 = vcmp.eq.s32.totalorder %v745, %v794
        %vm983 = vcmp.eq.s32.totalorder %v746, %v782
        %vm984 = vcmp.eq.s32.totalorder %v746, %v786
        %vm985 = vcmp.eq.s32.totalorder %v746, %v790
        %vm986 = vcmp.eq.s32.totalorder %v746, %v794
        %vm987 = vcmp.eq.s32.totalorder %v747, %v782
        %vm988 = vcmp.eq.s32.totalorder %v747, %v786
        %vm989 = vcmp.eq.s32.totalorder %v747, %v790
        %vm990 = vcmp.eq.s32.totalorder %v747, %v794
        %vm991 = vcmp.eq.s32.totalorder %v748, %v782
        %vm992 = vcmp.eq.s32.totalorder %v748, %v786
        %vm993 = vcmp.eq.s32.totalorder %v748, %v790
        %vm994 = vcmp.eq.s32.totalorder %v748, %v794
        %vm995 = vcmp.eq.s32.totalorder %v749, %v782
        %vm996 = vcmp.eq.s32.totalorder %v749, %v786
        %vm997 = vcmp.eq.s32.totalorder %v749, %v790
        %vm998 = vcmp.eq.s32.totalorder %v749, %v794
        %vm999 = vcmp.eq.s32.totalorder %v750, %v782
        %vm1000 = vcmp.eq.s32.totalorder %v750, %v786
        %vm1001 = vcmp.eq.s32.totalorder %v750, %v790
        %vm1002 = vcmp.eq.s32.totalorder %v750, %v794
        %vm1003 = vcmp.eq.s32.totalorder %v751, %v782
        %vm1004 = vcmp.eq.s32.totalorder %v751, %v786
        %vm1005 = vcmp.eq.s32.totalorder %v751, %v790
        %vm1006 = vcmp.eq.s32.totalorder %v751, %v794
        %vm1007 = vcmp.eq.s32.totalorder %v752, %v782
        %vm1008 = vcmp.eq.s32.totalorder %v752, %v786
        %vm1009 = vcmp.eq.s32.totalorder %v752, %v790
        %vm1010 = vcmp.eq.s32.totalorder %v752, %v794
        %vm1011 = vcmp.eq.s32.totalorder %v753, %v782
        %vm1012 = vcmp.eq.s32.totalorder %v753, %v786
        %vm1013 = vcmp.eq.s32.totalorder %v753, %v790
        %vm1014 = vcmp.eq.s32.totalorder %v753, %v794
        %vm1015 = vcmp.eq.s32.totalorder %v754, %v782
        %vm1016 = vcmp.eq.s32.totalorder %v754, %v786
        %vm1017 = vcmp.eq.s32.totalorder %v754, %v790
        %vm1018 = vcmp.eq.s32.totalorder %v754, %v794
        %vm1019 = vcmp.eq.s32.totalorder %v755, %v782
        %vm1020 = vcmp.eq.s32.totalorder %v755, %v786
        %vm1021 = vcmp.eq.s32.totalorder %v755, %v790
        %vm1022 = vcmp.eq.s32.totalorder %v755, %v794
        %vm1023 = vcmp.eq.s32.totalorder %v756, %v782
        %vm1024 = vcmp.eq.s32.totalorder %v756, %v786
        %vm1025 = vcmp.eq.s32.totalorder %v756, %v790
        %vm1026 = vcmp.eq.s32.totalorder %v756, %v794
        %vm1027 = vcmp.eq.s32.totalorder %v757, %v782
        %vm1028 = vcmp.eq.s32.totalorder %v757, %v786
        %vm1029 = vcmp.eq.s32.totalorder %v757, %v790
        %vm1030 = vcmp.eq.s32.totalorder %v757, %v794
        %vm1031 = vcmp.eq.s32.totalorder %v758, %v782
        %vm1032 = vcmp.eq.s32.totalorder %v758, %v786
        %vm1033 = vcmp.eq.s32.totalorder %v758, %v790
        %vm1034 = vcmp.eq.s32.totalorder %v758, %v794
        %vm1035 = vcmp.eq.s32.totalorder %v759, %v782
        %vm1036 = vcmp.eq.s32.totalorder %v759, %v786
        %vm1037 = vcmp.eq.s32.totalorder %v759, %v790
        %vm1038 = vcmp.eq.s32.totalorder %v759, %v794
        %vm1039 = vcmp.eq.s32.totalorder %v760, %v782
        %vm1040 = vcmp.eq.s32.totalorder %v760, %v786
        %vm1041 = vcmp.eq.s32.totalorder %v760, %v790
        %vm1042 = vcmp.eq.s32.totalorder %v760, %v794
        %vm1043 = vcmp.eq.s32.totalorder %v761, %v782
        %vm1044 = vcmp.eq.s32.totalorder %v761, %v786
        %vm1045 = vcmp.eq.s32.totalorder %v761, %v790
        %vm1046 = vcmp.eq.s32.totalorder %v761, %v794
        %vm1047 = vcmp.eq.s32.totalorder %v762, %v782
        %vm1048 = vcmp.eq.s32.totalorder %v762, %v786
        %vm1049 = vcmp.eq.s32.totalorder %v762, %v790
        %vm1050 = vcmp.eq.s32.totalorder %v762, %v794
        %v1051 = vsel %vm795, 1.0, 0.0
        %v1052 = vsel %vm796, 1.0, 0.0
        %v1053 = vsel %vm797, 1.0, 0.0
        %v1054 = vsel %vm798, 1.0, 0.0
        %v1055 = vsel %vm799, 1.0, 0.0
        %v1056 = vsel %vm800, 1.0, 0.0
        %v1057 = vsel %vm801, 1.0, 0.0
        %v1058 = vsel %vm802, 1.0, 0.0
        %v1059 = vsel %vm803, 1.0, 0.0
        %v1060 = vsel %vm804, 1.0, 0.0
        %v1061 = vsel %vm805, 1.0, 0.0
        %v1062 = vsel %vm806, 1.0, 0.0
        %v1063 = vsel %vm807, 1.0, 0.0
        %v1064 = vsel %vm808, 1.0, 0.0
        %v1065 = vsel %vm809, 1.0, 0.0
        %v1066 = vsel %vm810, 1.0, 0.0
        %v1067 = vsel %vm811, 1.0, 0.0
        %v1068 = vsel %vm812, 1.0, 0.0
        %v1069 = vsel %vm813, 1.0, 0.0
        %v1070 = vsel %vm814, 1.0, 0.0
        %v1071 = vsel %vm815, 1.0, 0.0
        %v1072 = vsel %vm816, 1.0, 0.0
        %v1073 = vsel %vm817, 1.0, 0.0
        %v1074 = vsel %vm818, 1.0, 0.0
        %v1075 = vsel %vm819, 1.0, 0.0
        %v1076 = vsel %vm820, 1.0, 0.0
        %v1077 = vsel %vm821, 1.0, 0.0
        %v1078 = vsel %vm822, 1.0, 0.0
        %v1079 = vsel %vm823, 1.0, 0.0
        %v1080 = vsel %vm824, 1.0, 0.0
        %v1081 = vsel %vm825, 1.0, 0.0
        %v1082 = vsel %vm826, 1.0, 0.0
        %v1083 = vsel %vm827, 1.0, 0.0
        %v1084 = vsel %vm828, 1.0, 0.0
        %v1085 = vsel %vm829, 1.0, 0.0
        %v1086 = vsel %vm830, 1.0, 0.0
        %v1087 = vsel %vm831, 1.0, 0.0
        %v1088 = vsel %vm832, 1.0, 0.0
        %v1089 = vsel %vm833, 1.0, 0.0
        %v1090 = vsel %vm834, 1.0, 0.0
        %v1091 = vsel %vm835, 1.0, 0.0
        %v1092 = vsel %vm836, 1.0, 0.0
        %v1093 = vsel %vm837, 1.0, 0.0
        %v1094 = vsel %vm838, 1.0, 0.0
        %v1095 = vsel %vm839, 1.0, 0.0
        %v1096 = vsel %vm840, 1.0, 0.0
        %v1097 = vsel %vm841, 1.0, 0.0
        %v1098 = vsel %vm842, 1.0, 0.0
        %v1099 = vsel %vm843, 1.0, 0.0
        %v1100 = vsel %vm844, 1.0, 0.0
        %v1101 = vsel %vm845, 1.0, 0.0
        %v1102 = vsel %vm846, 1.0, 0.0
        %v1103 = vsel %vm847, 1.0, 0.0
        %v1104 = vsel %vm848, 1.0, 0.0
        %v1105 = vsel %vm849, 1.0, 0.0
        %v1106 = vsel %vm850, 1.0, 0.0
        %v1107 = vsel %vm851, 1.0, 0.0
        %v1108 = vsel %vm852, 1.0, 0.0
        %v1109 = vsel %vm853, 1.0, 0.0
        %v1110 = vsel %vm854, 1.0, 0.0
        %v1111 = vsel %vm855, 1.0, 0.0
        %v1112 = vsel %vm856, 1.0, 0.0
        %v1113 = vsel %vm857, 1.0, 0.0
        %v1114 = vsel %vm858, 1.0, 0.0
        %v1115 = vsel %vm859, 1.0, 0.0
        %v1116 = vsel %vm860, 1.0, 0.0
        %v1117 = vsel %vm861, 1.0, 0.0
        %v1118 = vsel %vm862, 1.0, 0.0
        %v1119 = vsel %vm863, 1.0, 0.0
        %v1120 = vsel %vm864, 1.0, 0.0
        %v1121 = vsel %vm865, 1.0, 0.0
        %v1122 = vsel %vm866, 1.0, 0.0
        %v1123 = vsel %vm867, 1.0, 0.0
        %v1124 = vsel %vm868, 1.0, 0.0
        %v1125 = vsel %vm869, 1.0, 0.0
        %v1126 = vsel %vm870, 1.0, 0.0
        %v1127 = vsel %vm871, 1.0, 0.0
        %v1128 = vsel %vm872, 1.0, 0.0
        %v1129 = vsel %vm873, 1.0, 0.0
        %v1130 = vsel %vm874, 1.0, 0.0
        %v1131 = vsel %vm875, 1.0, 0.0
        %v1132 = vsel %vm876, 1.0, 0.0
        %v1133 = vsel %vm877, 1.0, 0.0
        %v1134 = vsel %vm878, 1.0, 0.0
        %v1135 = vsel %vm879, 1.0, 0.0
        %v1136 = vsel %vm880, 1.0, 0.0
        %v1137 = vsel %vm881, 1.0, 0.0
        %v1138 = vsel %vm882, 1.0, 0.0
        %v1139 = vsel %vm883, 1.0, 0.0
        %v1140 = vsel %vm884, 1.0, 0.0
        %v1141 = vsel %vm885, 1.0, 0.0
        %v1142 = vsel %vm886, 1.0, 0.0
        %v1143 = vsel %vm887, 1.0, 0.0
        %v1144 = vsel %vm888, 1.0, 0.0
        %v1145 = vsel %vm889, 1.0, 0.0
        %v1146 = vsel %vm890, 1.0, 0.0
        %v1147 = vsel %vm891, 1.0, 0.0
        %v1148 = vsel %vm892, 1.0, 0.0
        %v1149 = vsel %vm893, 1.0, 0.0
        %v1150 = vsel %vm894, 1.0, 0.0
        %v1151 = vsel %vm895, 1.0, 0.0
        %v1152 = vsel %vm896, 1.0, 0.0
        %v1153 = vsel %vm897, 1.0, 0.0
        %v1154 = vsel %vm898, 1.0, 0.0
        %v1155 = vsel %vm899, 1.0, 0.0
        %v1156 = vsel %vm900, 1.0, 0.0
        %v1157 = vsel %vm901, 1.0, 0.0
        %v1158 = vsel %vm902, 1.0, 0.0
        %v1159 = vsel %vm903, 1.0, 0.0
        %v1160 = vsel %vm904, 1.0, 0.0
        %v1161 = vsel %vm905, 1.0, 0.0
        %v1162 = vsel %vm906, 1.0, 0.0
        %v1163 = vsel %vm907, 1.0, 0.0
        %v1164 = vsel %vm908, 1.0, 0.0
        %v1165 = vsel %vm909, 1.0, 0.0
        %v1166 = vsel %vm910, 1.0, 0.0
        %v1167 = vsel %vm911, 1.0, 0.0
        %v1168 = vsel %vm912, 1.0, 0.0
        %v1169 = vsel %vm913, 1.0, 0.0
        %v1170 = vsel %vm914, 1.0, 0.0
        %v1171 = vsel %vm915, 1.0, 0.0
        %v1172 = vsel %vm916, 1.0, 0.0
        %v1173 = vsel %vm917, 1.0, 0.0
        %v1174 = vsel %vm918, 1.0, 0.0
        %v1175 = vsel %vm919, 1.0, 0.0
        %v1176 = vsel %vm920, 1.0, 0.0
        %v1177 = vsel %vm921, 1.0, 0.0
        %v1178 = vsel %vm922, 1.0, 0.0
        %v1179 = vsel %vm923, 1.0, 0.0
        %v1180 = vsel %vm924, 1.0, 0.0
        %v1181 = vsel %vm925, 1.0, 0.0
        %v1182 = vsel %vm926, 1.0, 0.0
        %v1183 = vsel %vm927, 1.0, 0.0
        %v1184 = vsel %vm928, 1.0, 0.0
        %v1185 = vsel %vm929, 1.0, 0.0
        %v1186 = vsel %vm930, 1.0, 0.0
        %v1187 = vsel %vm931, 1.0, 0.0
        %v1188 = vsel %vm932, 1.0, 0.0
        %v1189 = vsel %vm933, 1.0, 0.0
        %v1190 = vsel %vm934, 1.0, 0.0
        %v1191 = vsel %vm935, 1.0, 0.0
        %v1192 = vsel %vm936, 1.0, 0.0
        %v1193 = vsel %vm937, 1.0, 0.0
        %v1194 = vsel %vm938, 1.0, 0.0
        %v1195 = vsel %vm939, 1.0, 0.0
        %v1196 = vsel %vm940, 1.0, 0.0
        %v1197 = vsel %vm941, 1.0, 0.0
        %v1198 = vsel %vm942, 1.0, 0.0
        %v1199 = vsel %vm943, 1.0, 0.0
        %v1200 = vsel %vm944, 1.0, 0.0
        %v1201 = vsel %vm945, 1.0, 0.0
        %v1202 = vsel %vm946, 1.0, 0.0
        %v1203 = vsel %vm947, 1.0, 0.0
        %v1204 = vsel %vm948, 1.0, 0.0
        %v1205 = vsel %vm949, 1.0, 0.0
        %v1206 = vsel %vm950, 1.0, 0.0
        %v1207 = vsel %vm951, 1.0, 0.0
        %v1208 = vsel %vm952, 1.0, 0.0
        %v1209 = vsel %vm953, 1.0, 0.0
        %v1210 = vsel %vm954, 1.0, 0.0
        %v1211 = vsel %vm955, 1.0, 0.0
        %v1212 = vsel %vm956, 1.0, 0.0
        %v1213 = vsel %vm957, 1.0, 0.0
        %v1214 = vsel %vm958, 1.0, 0.0
        %v1215 = vsel %vm959, 1.0, 0.0
        %v1216 = vsel %vm960, 1.0, 0.0
        %v1217 = vsel %vm961, 1.0, 0.0
        %v1218 = vsel %vm962, 1.0, 0.0
        %v1219 = vsel %vm963, 1.0, 0.0
        %v1220 = vsel %vm964, 1.0, 0.0
        %v1221 = vsel %vm965, 1.0, 0.0
        %v1222 = vsel %vm966, 1.0, 0.0
        %v1223 = vsel %vm967, 1.0, 0.0
        %v1224 = vsel %vm968, 1.0, 0.0
        %v1225 = vsel %vm969, 1.0, 0.0
        %v1226 = vsel %vm970, 1.0, 0.0
        %v1227 = vsel %vm971, 1.0, 0.0
        %v1228 = vsel %vm972, 1.0, 0.0
        %v1229 = vsel %vm973, 1.0, 0.0
        %v1230 = vsel %vm974, 1.0, 0.0
        %v1231 = vsel %vm975, 1.0, 0.0
        %v1232 = vsel %vm976, 1.0, 0.0
        %v1233 = vsel %vm977, 1.0, 0.0
        %v1234 = vsel %vm978, 1.0, 0.0
        %v1235 = vsel %vm979, 1.0, 0.0
        %v1236 = vsel %vm980, 1.0, 0.0
        %v1237 = vsel %vm981, 1.0, 0.0
        %v1238 = vsel %vm982, 1.0, 0.0
        %v1239 = vsel %vm983, 1.0, 0.0
        %v1240 = vsel %vm984, 1.0, 0.0
        %v1241 = vsel %vm985, 1.0, 0.0
        %v1242 = vsel %vm986, 1.0, 0.0
        %v1243 = vsel %vm987, 1.0, 0.0
        %v1244 = vsel %vm988, 1.0, 0.0
        %v1245 = vsel %vm989, 1.0, 0.0
        %v1246 = vsel %vm990, 1.0, 0.0
        %v1247 = vsel %vm991, 1.0, 0.0
        %v1248 = vsel %vm992, 1.0, 0.0
        %v1249 = vsel %vm993, 1.0, 0.0
        %v1250 = vsel %vm994, 1.0, 0.0
        %v1251 = vsel %vm995, 1.0, 0.0
        %v1252 = vsel %vm996, 1.0, 0.0
        %v1253 = vsel %vm997, 1.0, 0.0
        %v1254 = vsel %vm998, 1.0, 0.0
        %v1255 = vsel %vm999, 1.0, 0.0
        %v1256 = vsel %vm1000, 1.0, 0.0
        %v1257 = vsel %vm1001, 1.0, 0.0
        %v1258 = vsel %vm1002, 1.0, 0.0
        %v1259 = vsel %vm1003, 1.0, 0.0
        %v1260 = vsel %vm1004, 1.0, 0.0
        %v1261 = vsel %vm1005, 1.0, 0.0
        %v1262 = vsel %vm1006, 1.0, 0.0
        %v1263 = vsel %vm1007, 1.0, 0.0
        %v1264 = vsel %vm1008, 1.0, 0.0
        %v1265 = vsel %vm1009, 1.0, 0.0
        %v1266 = vsel %vm1010, 1.0, 0.0
        %v1267 = vsel %vm1011, 1.0, 0.0
        %v1268 = vsel %vm1012, 1.0, 0.0
        %v1269 = vsel %vm1013, 1.0, 0.0
        %v1270 = vsel %vm1014, 1.0, 0.0
        %v1271 = vsel %vm1015, 1.0, 0.0
        %v1272 = vsel %vm1016, 1.0, 0.0
        %v1273 = vsel %vm1017, 1.0, 0.0
        %v1274 = vsel %vm1018, 1.0, 0.0
        %v1275 = vsel %vm1019, 1.0, 0.0
        %v1276 = vsel %vm1020, 1.0, 0.0
        %v1277 = vsel %vm1021, 1.0, 0.0
        %v1278 = vsel %vm1022, 1.0, 0.0
        %v1279 = vsel %vm1023, 1.0, 0.0
        %v1280 = vsel %vm1024, 1.0, 0.0
        %v1281 = vsel %vm1025, 1.0, 0.0
        %v1282 = vsel %vm1026, 1.0, 0.0
        %v1283 = vsel %vm1027, 1.0, 0.0
        %v1284 = vsel %vm1028, 1.0, 0.0
        %v1285 = vsel %vm1029, 1.0, 0.0
        %v1286 = vsel %vm1030, 1.0, 0.0
        %v1287 = vsel %vm1031, 1.0, 0.0
        %v1288 = vsel %vm1032, 1.0, 0.0
        %v1289 = vsel %vm1033, 1.0, 0.0
        %v1290 = vsel %vm1034, 1.0, 0.0
        %v1291 = vsel %vm1035, 1.0, 0.0
        %v1292 = vsel %vm1036, 1.0, 0.0
        %v1293 = vsel %vm1037, 1.0, 0.0
        %v1294 = vsel %vm1038, 1.0, 0.0
        %v1295 = vsel %vm1039, 1.0, 0.0
        %v1296 = vsel %vm1040, 1.0, 0.0
        %v1297 = vsel %vm1041, 1.0, 0.0
        %v1298 = vsel %vm1042, 1.0, 0.0
        %v1299 = vsel %vm1043, 1.0, 0.0
        %v1300 = vsel %vm1044, 1.0, 0.0
        %v1301 = vsel %vm1045, 1.0, 0.0
        %v1302 = vsel %vm1046, 1.0, 0.0
        %v1303 = vsel %vm1047, 1.0, 0.0
        %v1304 = vsel %vm1048, 1.0, 0.0
        %v1305 = vsel %vm1049, 1.0, 0.0
        %v1306 = vsel %vm1050, 1.0, 0.0
        %v1307 = vld [vmem:[#allocation3] sm:$0xff]
        %v1308 = vld [vmem:[#allocation3 + $0x8] sm:$0xff]
        %v1309 = vld [vmem:[#allocation3 + $0x10] sm:$0xff]
        %v1310 = vld [vmem:[#allocation3 + $0x18] sm:$0xff]
        %v1311 = vld [vmem:[#allocation3 + $0x20] sm:$0xff]
        %v1312 = vld [vmem:[#allocation3 + $0x28] sm:$0xff]
        %v1313 = vld [vmem:[#allocation3 + $0x30] sm:$0xff]
        %v1314 = vld [vmem:[#allocation3 + $0x38] sm:$0xff]
        %v1315 = vld [vmem:[#allocation3 + $0x40] sm:$0xff]
        %v1316 = vld [vmem:[#allocation3 + $0x48] sm:$0xff]
        %v1317 = vld [vmem:[#allocation3 + $0x50] sm:$0xff]
        %v1318 = vld [vmem:[#allocation3 + $0x58] sm:$0xff]
        %1319 = vmatprep.subr.mxu0 %v1052
        %1320 = vmatpush1.msra.mxu0 %v1051
        %1321 = vmatprep.subr.mxu0 %v1056
        %1322 = vmatpush1.msra.mxu0 %v1055
        %1323 = vmatprep.subr.mxu0 %v1060
        %1324 = vmatpush1.msra.mxu0 %v1059
        %1325 = vmatprep.subr.mxu0 %v1064
        %1326 = vmatpush1.msra.mxu0 %v1063
        %1327 = vmatprep.subr.mxu0 %v1068
        %1328 = vmatpush1.msra.mxu0 %v1067
        %1329 = vmatprep.subr.mxu0 %v1072
        %1330 = vmatpush1.msra.mxu0 %v1071
        %1331 = vmatprep.subr.mxu0 %v1076
        %1332 = vmatpush1.msra.mxu0 %v1075
        %1333 = vmatprep.subr.mxu0 %v1080
        %1334 = vmatpush1.msra.mxu0 %v1079
        %1335 = vmatprep.subr.mxu0 %v1084
        %1336 = vmatpush1.msra.mxu0 %v1083
        %1337 = vmatprep.subr.mxu0 %v1088
        %1338 = vmatpush1.msra.mxu0 %v1087
        %1339 = vmatprep.subr.mxu0 %v1092
        %1340 = vmatpush1.msra.mxu0 %v1091
        %1341 = vmatprep.subr.mxu0 %v1096
        %1342 = vmatpush1.msra.mxu0 %v1095
        %1343 = vmatprep.subr.mxu0 %v1100
        %1344 = vmatpush1.msra.mxu0 %v1099
        %1345 = vmatprep.subr.mxu0 %v1104
        %1346 = vmatpush1.msra.mxu0 %v1103
        %1347 = vmatprep.subr.mxu0 %v1108
        %1348 = vmatpush1.msra.mxu0 %v1107
        %1349 = vmatprep.subr.mxu0 %v1112
        %1350 = vmatpush1.msra.mxu0 %v1111
        %1351 = vmatprep.subr.mxu0 %v1116
        %1352 = vmatpush1.msra.mxu0 %v1115
        %1353 = vmatprep.subr.mxu0 %v1120
        %1354 = vmatpush1.msra.mxu0 %v1119
        %1355 = vmatprep.subr.mxu0 %v1124
        %1356 = vmatpush1.msra.mxu0 %v1123
        %1357 = vmatprep.subr.mxu0 %v1128
        %1358 = vmatpush1.msra.mxu0 %v1127
        %1359 = vmatprep.subr.mxu0 %v1132
        %1360 = vmatpush1.msra.mxu0 %v1131
        %1361 = vmatprep.subr.mxu0 %v1136
        %1362 = vmatpush1.msra.mxu0 %v1135
        %1363 = vmatprep.subr.mxu0 %v1140
        %1364 = vmatpush1.msra.mxu0 %v1139
        %1365 = vmatprep.subr.mxu0 %v1144
        %1366 = vmatpush1.msra.mxu0 %v1143
        %1367 = vmatprep.subr.mxu0 %v1148
        %1368 = vmatpush1.msra.mxu0 %v1147
        %1369 = vmatprep.subr.mxu0 %v1152
        %1370 = vmatpush1.msra.mxu0 %v1151
        %1371 = vmatprep.subr.mxu0 %v1156
        %1372 = vmatpush1.msra.mxu0 %v1155
        %1373 = vmatprep.subr.mxu0 %v1160
        %1374 = vmatpush1.msra.mxu0 %v1159
        %1375 = vmatprep.subr.mxu0 %v1164
        %1376 = vmatpush1.msra.mxu0 %v1163
        %1377 = vmatprep.subr.mxu0 %v1168
        %1378 = vmatpush1.msra.mxu0 %v1167
        %1379 = vmatprep.subr.mxu0 %v1172
        %1380 = vmatpush1.msra.mxu0 %v1171
        %1381 = vmatprep.subr.mxu0 %v1176
        %1382 = vmatpush1.msra.mxu0 %v1175
        %1383 = vmatprep.mubr.f32.mxu0 %v1308
        %1384 = vmatmul.mubr.f32.gmra.mrb[0].mxu0 %v1307
        %v1385 = vpop.f32.mrb[0].mxu0
        %v1386 = vadd.f32 0.0, %v1385
        %v1387 = vpop.f32.mrb[0].mxu0
        %v1388 = vadd.f32 0.0, %v1387
        %1389 = vmatprep.mubr.f32.mxu0 %v1312
        %1390 = vmatmul.mubr.f32.gmra.mrb[0].mxu0 %v1311
        %v1391 = vpop.f32.mrb[0].mxu0
        %v1392 = vadd.f32 0.0, %v1391
        %v1393 = vpop.f32.mrb[0].mxu0
        %v1394 = vadd.f32 0.0, %v1393
        %1395 = vmatprep.mubr.f32.mxu0 %v1316
        %1396 = vmatmul.mubr.f32.gmra.mrb[0].mxu0 %v1315
        %v1397 = vpop.f32.mrb[0].mxu0
        %v1398 = vadd.f32 0.0, %v1397
        %v1399 = vpop.f32.mrb[0].mxu0
        %v1400 = vadd.f32 0.0, %v1399
        %1401 = vdwg.mxu0
        %1402 = vmatprep.subr.mxu0 %v1180
        %1403 = vmatpush1.msra.mxu0 %v1179
        %1404 = vmatprep.subr.mxu0 %v1184
        %1405 = vmatpush1.msra.mxu0 %v1183
        %1406 = vmatprep.subr.mxu0 %v1188
        %1407 = vmatpush1.msra.mxu0 %v1187
        %1408 = vmatprep.subr.mxu0 %v1192
        %1409 = vmatpush1.msra.mxu0 %v1191
        %1410 = vmatprep.subr.mxu0 %v1196
        %1411 = vmatpush1.msra.mxu0 %v1195
        %1412 = vmatprep.subr.mxu0 %v1200
        %1413 = vmatpush1.msra.mxu0 %v1199
        %1414 = vmatprep.subr.mxu0 %v1204
        %1415 = vmatpush1.msra.mxu0 %v1203
        %1416 = vmatprep.subr.mxu0 %v1208
        %1417 = vmatpush1.msra.mxu0 %v1207
        %1418 = vmatprep.subr.mxu0 %v1212
        %1419 = vmatpush1.msra.mxu0 %v1211
        %1420 = vmatprep.subr.mxu0 %v1216
        %1421 = vmatpush1.msra.mxu0 %v1215
        %1422 = vmatprep.subr.mxu0 %v1220
        %1423 = vmatpush1.msra.mxu0 %v1219
        %1424 = vmatprep.subr.mxu0 %v1224
        %1425 = vmatpush1.msra.mxu0 %v1223
        %1426 = vmatprep.subr.mxu0 %v1228
        %1427 = vmatpush1.msra.mxu0 %v1227
        %1428 = vmatprep.subr.mxu0 %v1232
        %1429 = vmatpush1.msra.mxu0 %v1231
        %1430 = vmatprep.subr.mxu0 %v1236
        %1431 = vmatpush1.msra.mxu0 %v1235
        %1432 = vmatprep.subr.mxu0 %v1240
        %1433 = vmatpush1.msra.mxu0 %v1239
        %1434 = vmatprep.subr.mxu0 %v1244
        %1435 = vmatpush1.msra.mxu0 %v1243
        %1436 = vmatprep.subr.mxu0 %v1248
        %1437 = vmatpush1.msra.mxu0 %v1247
        %1438 = vmatprep.subr.mxu0 %v1252
        %1439 = vmatpush1.msra.mxu0 %v1251
        %1440 = vmatprep.subr.mxu0 %v1256
        %1441 = vmatpush1.msra.mxu0 %v1255
        %1442 = vmatprep.subr.mxu0 %v1260
        %1443 = vmatpush1.msra.mxu0 %v1259
        %1444 = vmatprep.subr.mxu0 %v1264
        %1445 = vmatpush1.msra.mxu0 %v1263
        %1446 = vmatprep.subr.mxu0 %v1268
        %1447 = vmatpush1.msra.mxu0 %v1267
        %1448 = vmatprep.subr.mxu0 %v1272
        %1449 = vmatpush1.msra.mxu0 %v1271
        %1450 = vmatprep.subr.mxu0 %v1276
        %1451 = vmatpush1.msra.mxu0 %v1275
        %1452 = vmatprep.subr.mxu0 %v1280
        %1453 = vmatpush1.msra.mxu0 %v1279
        %1454 = vmatprep.subr.mxu0 %v1284
        %1455 = vmatpush1.msra.mxu0 %v1283
        %1456 = vmatprep.subr.mxu0 %v1288
        %1457 = vmatpush1.msra.mxu0 %v1287
        %1458 = vmatprep.subr.mxu0 %v1292
        %1459 = vmatpush1.msra.mxu0 %v1291
        %1460 = vmatprep.subr.mxu0 %v1296
        %1461 = vmatpush1.msra.mxu0 %v1295
        %1462 = vmatprep.subr.mxu0 %v1300
        %1463 = vmatpush1.msra.mxu0 %v1299
        %1464 = vmatprep.subr.mxu0 %v1304
        %1465 = vmatpush1.msra.mxu0 %v1303
        %1466 = vmatprep.mubr.f32.mxu0 %v1310
        %1467 = vmatmul.mubr.f32.gmra.mrb[0].mxu0 %v1309
        %v1468 = vpop.f32.mrb[0].mxu0
        %v1469 = vadd.f32 %v1386, %v1468
        %v1470 = vpop.f32.mrb[0].mxu0
        %v1471 = vadd.f32 %v1388, %v1470
        %1472 = vmatprep.mubr.f32.mxu0 %v1314
        %1473 = vmatmul.mubr.f32.gmra.mrb[0].mxu0 %v1313
        %v1474 = vpop.f32.mrb[0].mxu0
        %v1475 = vadd.f32 %v1392, %v1474
        %v1476 = vpop.f32.mrb[0].mxu0
        %v1477 = vadd.f32 %v1394, %v1476
        %1478 = vmatprep.mubr.f32.mxu0 %v1318
        %1479 = vmatmul.mubr.f32.gmra.mrb[0].mxu0 %v1317
        %v1480 = vpop.f32.mrb[0].mxu0
        %v1481 = vadd.f32 %v1398, %v1480
        %v1482 = vpop.f32.mrb[0].mxu0
        %v1483 = vadd.f32 %v1400, %v1482
        %1484 = vdwg.mxu0
        %1485 = vmatprep.subr.mxu0 %v1054
        %1486 = vmatpush1.msra.mxu0 %v1053
        %1487 = vmatprep.subr.mxu0 %v1058
        %1488 = vmatpush1.msra.mxu0 %v1057
        %1489 = vmatprep.subr.mxu0 %v1062
        %1490 = vmatpush1.msra.mxu0 %v1061
        %1491 = vmatprep.subr.mxu0 %v1066
        %1492 = vmatpush1.msra.mxu0 %v1065
        %1493 = vmatprep.subr.mxu0 %v1070
        %1494 = vmatpush1.msra.mxu0 %v1069
        %1495 = vmatprep.subr.mxu0 %v1074
        %1496 = vmatpush1.msra.mxu0 %v1073
        %1497 = vmatprep.subr.mxu0 %v1078
        %1498 = vmatpush1.msra.mxu0 %v1077
        %1499 = vmatprep.subr.mxu0 %v1082
        %1500 = vmatpush1.msra.mxu0 %v1081
        %1501 = vmatprep.subr.mxu0 %v1086
        %1502 = vmatpush1.msra.mxu0 %v1085
        %1503 = vmatprep.subr.mxu0 %v1090
        %1504 = vmatpush1.msra.mxu0 %v1089
        %1505 = vmatprep.subr.mxu0 %v1094
        %1506 = vmatpush1.msra.mxu0 %v1093
        %1507 = vmatprep.subr.mxu0 %v1098
        %1508 = vmatpush1.msra.mxu0 %v1097
        %1509 = vmatprep.subr.mxu0 %v1102
        %1510 = vmatpush1.msra.mxu0 %v1101
        %1511 = vmatprep.subr.mxu0 %v1106
        %1512 = vmatpush1.msra.mxu0 %v1105
        %1513 = vmatprep.subr.mxu0 %v1110
        %1514 = vmatpush1.msra.mxu0 %v1109
        %1515 = vmatprep.subr.mxu0 %v1114
        %1516 = vmatpush1.msra.mxu0 %v1113
        %1517 = vmatprep.subr.mxu0 %v1118
        %1518 = vmatpush1.msra.mxu0 %v1117
        %1519 = vmatprep.subr.mxu0 %v1122
        %1520 = vmatpush1.msra.mxu0 %v1121
        %1521 = vmatprep.subr.mxu0 %v1126
        %1522 = vmatpush1.msra.mxu0 %v1125
        %1523 = vmatprep.subr.mxu0 %v1130
        %1524 = vmatpush1.msra.mxu0 %v1129
        %1525 = vmatprep.subr.mxu0 %v1134
        %1526 = vmatpush1.msra.mxu0 %v1133
        %1527 = vmatprep.subr.mxu0 %v1138
        %1528 = vmatpush1.msra.mxu0 %v1137
        %1529 = vmatprep.subr.mxu0 %v1142
        %1530 = vmatpush1.msra.mxu0 %v1141
        %1531 = vmatprep.subr.mxu0 %v1146
        %1532 = vmatpush1.msra.mxu0 %v1145
        %1533 = vmatprep.subr.mxu0 %v1150
        %1534 = vmatpush1.msra.mxu0 %v1149
        %1535 = vmatprep.subr.mxu0 %v1154
        %1536 = vmatpush1.msra.mxu0 %v1153
        %1537 = vmatprep.subr.mxu0 %v1158
        %1538 = vmatpush1.msra.mxu0 %v1157
        %1539 = vmatprep.subr.mxu0 %v1162
        %1540 = vmatpush1.msra.mxu0 %v1161
        %1541 = vmatprep.subr.mxu0 %v1166
        %1542 = vmatpush1.msra.mxu0 %v1165
        %1543 = vmatprep.subr.mxu0 %v1170
        %1544 = vmatpush1.msra.mxu0 %v1169
        %1545 = vmatprep.subr.mxu0 %v1174
        %1546 = vmatpush1.msra.mxu0 %v1173
        %1547 = vmatprep.subr.mxu0 %v1178
        %1548 = vmatpush1.msra.mxu0 %v1177
        %1549 = vmatprep.mubr.f32.mxu0 %v1308
        %1550 = vmatmul.mubr.f32.gmra.mrb[0].mxu0 %v1307
        %v1551 = vpop.f32.mrb[0].mxu0
        %v1552 = vadd.f32 0.0, %v1551
        %v1553 = vpop.f32.mrb[0].mxu0
        %v1554 = vadd.f32 0.0, %v1553
        %1555 = vmatprep.mubr.f32.mxu0 %v1312
        %1556 = vmatmul.mubr.f32.gmra.mrb[0].mxu0 %v1311
        %v1557 = vpop.f32.mrb[0].mxu0
        %v1558 = vadd.f32 0.0, %v1557
        %v1559 = vpop.f32.mrb[0].mxu0
        %v1560 = vadd.f32 0.0, %v1559
        %1561 = vmatprep.mubr.f32.mxu0 %v1316
        %1562 = vmatmul.mubr.f32.gmra.mrb[0].mxu0 %v1315
        %v1563 = vpop.f32.mrb[0].mxu0
        %v1564 = vadd.f32 0.0, %v1563
        %v1565 = vpop.f32.mrb[0].mxu0
        %v1566 = vadd.f32 0.0, %v1565
        %1567 = vdwg.mxu0
        %1568 = vmatprep.subr.mxu0 %v1182
        %1569 = vmatpush1.msra.mxu0 %v1181
        %1570 = vmatprep.subr.mxu0 %v1186
        %1571 = vmatpush1.msra.mxu0 %v1185
        %1572 = vmatprep.subr.mxu0 %v1190
        %1573 = vmatpush1.msra.mxu0 %v1189
        %1574 = vmatprep.subr.mxu0 %v1194
        %1575 = vmatpush1.msra.mxu0 %v1193
        %1576 = vmatprep.subr.mxu0 %v1198
        %1577 = vmatpush1.msra.mxu0 %v1197
        %1578 = vmatprep.subr.mxu0 %v1202
        %1579 = vmatpush1.msra.mxu0 %v1201
        %1580 = vmatprep.subr.mxu0 %v1206
        %1581 = vmatpush1.msra.mxu0 %v1205
        %1582 = vmatprep.subr.mxu0 %v1210
        %1583 = vmatpush1.msra.mxu0 %v1209
        %1584 = vmatprep.subr.mxu0 %v1214
        %1585 = vmatpush1.msra.mxu0 %v1213
        %1586 = vmatprep.subr.mxu0 %v1218
        %1587 = vmatpush1.msra.mxu0 %v1217
        %1588 = vmatprep.subr.mxu0 %v1222
        %1589 = vmatpush1.msra.mxu0 %v1221
        %1590 = vmatprep.subr.mxu0 %v1226
        %1591 = vmatpush1.msra.mxu0 %v1225
        %1592 = vmatprep.subr.mxu0 %v1230
        %1593 = vmatpush1.msra.mxu0 %v1229
        %1594 = vmatprep.subr.mxu0 %v1234
        %1595 = vmatpush1.msra.mxu0 %v1233
        %1596 = vmatprep.subr.mxu0 %v1238
        %1597 = vmatpush1.msra.mxu0 %v1237
        %1598 = vmatprep.subr.mxu0 %v1242
        %1599 = vmatpush1.msra.mxu0 %v1241
        %1600 = vmatprep.subr.mxu0 %v1246
        %1601 = vmatpush1.msra.mxu0 %v1245
        %1602 = vmatprep.subr.mxu0 %v1250
        %1603 = vmatpush1.msra.mxu0 %v1249
        %1604 = vmatprep.subr.mxu0 %v1254
        %1605 = vmatpush1.msra.mxu0 %v1253
        %1606 = vmatprep.subr.mxu0 %v1258
        %1607 = vmatpush1.msra.mxu0 %v1257
        %1608 = vmatprep.subr.mxu0 %v1262
        %1609 = vmatpush1.msra.mxu0 %v1261
        %1610 = vmatprep.subr.mxu0 %v1266
        %1611 = vmatpush1.msra.mxu0 %v1265
        %1612 = vmatprep.subr.mxu0 %v1270
        %1613 = vmatpush1.msra.mxu0 %v1269
        %1614 = vmatprep.subr.mxu0 %v1274
        %1615 = vmatpush1.msra.mxu0 %v1273
        %1616 = vmatprep.subr.mxu0 %v1278
        %1617 = vmatpush1.msra.mxu0 %v1277
        %1618 = vmatprep.subr.mxu0 %v1282
        %1619 = vmatpush1.msra.mxu0 %v1281
        %1620 = vmatprep.subr.mxu0 %v1286
        %1621 = vmatpush1.msra.mxu0 %v1285
        %1622 = vmatprep.subr.mxu0 %v1290
        %1623 = vmatpush1.msra.mxu0 %v1289
        %1624 = vmatprep.subr.mxu0 %v1294
        %1625 = vmatpush1.msra.mxu0 %v1293
        %1626 = vmatprep.subr.mxu0 %v1298
        %1627 = vmatpush1.msra.mxu0 %v1297
        %1628 = vmatprep.subr.mxu0 %v1302
        %1629 = vmatpush1.msra.mxu0 %v1301
        %1630 = vmatprep.subr.mxu0 %v1306
        %1631 = vmatpush1.msra.mxu0 %v1305
        %1632 = vmatprep.mubr.f32.mxu0 %v1310
        %1633 = vmatmul.mubr.f32.gmra.mrb[0].mxu0 %v1309
        %v1634 = vpop.f32.mrb[0].mxu0
        %v1635 = vadd.f32 %v1552, %v1634
        %v1636 = vpop.f32.mrb[0].mxu0
        %v1637 = vadd.f32 %v1554, %v1636
        %1638 = vmatprep.mubr.f32.mxu0 %v1314
        %1639 = vmatmul.mubr.f32.gmra.mrb[0].mxu0 %v1313
        %v1640 = vpop.f32.mrb[0].mxu0
        %v1641 = vadd.f32 %v1558, %v1640
        %v1642 = vpop.f32.mrb[0].mxu0
        %v1643 = vadd.f32 %v1560, %v1642
        %1644 = vmatprep.mubr.f32.mxu0 %v1318
        %1645 = vmatmul.mubr.f32.gmra.mrb[0].mxu0 %v1317
        %v1646 = vpop.f32.mrb[0].mxu0
        %v1647 = vadd.f32 %v1564, %v1646
        %v1648 = vpop.f32.mrb[0].mxu0
        %v1649 = vadd.f32 %v1566, %v1648
        %1650 = vdwg.mxu0
        %v1653 = vrot.slane %v666, 5
        %v1654 = vrot.slane %v1653, 4
        %v1655 = vrot.slane %v667, 5
        %v1656 = vrot.slane %v1655, 4
        %v1659 = vmul.f32 %v666, %v1654
        %v1660 = vmul.f32 %v667, %v1656
        %v1661 = vrot.slane %v666, 6
        %v1662 = vrot.slane %v1661, 4
        %v1663 = vrot.slane %v667, 6
        %v1664 = vrot.slane %v1663, 4
        %v1667 = vmul.f32 %v1659, %v1662
        %v1668 = vmul.f32 %v1660, %v1664
        %v1671 = vlaneseq
        %v1672 = vshrl.u32 %v1671, 7
        %v1673 = vsub.s32 0, %v1672
        %v1674 = vrot.slane %v1667, %v1673
        %v1675 = vlaneseq
        %v1676 = vshrl.u32 %v1675, 7
        %v1677 = vsub.s32 4, %v1676
        %v1678 = vrot.slane %v1667, %v1677
        %v1679 = vlaneseq
        %v1680 = vshrl.u32 %v1679, 7
        %v1681 = vsub.s32 0, %v1680
        %v1682 = vrot.slane %v1668, %v1681
        %v1683 = vlaneseq
        %v1684 = vshrl.u32 %v1683, 7
        %v1685 = vsub.s32 4, %v1684
        %v1686 = vrot.slane %v1668, %v1685
        %v1691 = vlaneseq
        %v1692 = vshrl.u32 %v1691, 7
        %v1693 = vsub.s32 0, %v1692
        %v1694 = vrot.slane %v1674, %v1693
        %v1695 = vlaneseq
        %v1696 = vshrl.u32 %v1695, 7
        %v1697 = vsub.s32 0, %v1696
        %v1698 = vrot.slane %v1678, %v1697
        %v1699 = vlaneseq
        %v1700 = vshrl.u32 %v1699, 7
        %v1701 = vsub.s32 0, %v1700
        %v1702 = vrot.slane %v1682, %v1701
        %v1703 = vlaneseq
        %v1704 = vshrl.u32 %v1703, 7
        %v1705 = vsub.s32 0, %v1704
        %v1706 = vrot.slane %v1686, %v1705
        %v1707 = vmul.f32 %v1469, %v1694
        %v1708 = vmul.f32 %v1471, %v1698
        %v1709 = vmul.f32 %v1635, %v1702
        %v1710 = vmul.f32 %v1637, %v1706
        %v1713 = vrot.slane %v674, 6
        %v1714 = vrot.slane %v1713, 4
        %v1715 = vrot.slane %v675, 6
        %v1716 = vrot.slane %v1715, 4
        %v1719 = vmul.f32 %v1659, %v1714
        %v1720 = vmul.f32 %v1660, %v1716
        %v1723 = vlaneseq
        %v1724 = vshrl.u32 %v1723, 7
        %v1725 = vsub.s32 0, %v1724
        %v1726 = vrot.slane %v1719, %v1725
        %v1727 = vlaneseq
        %v1728 = vshrl.u32 %v1727, 7
        %v1729 = vsub.s32 4, %v1728
        %v1730 = vrot.slane %v1719, %v1729
        %v1731 = vlaneseq
        %v1732 = vshrl.u32 %v1731, 7
        %v1733 = vsub.s32 0, %v1732
        %v1734 = vrot.slane %v1720, %v1733
        %v1735 = vlaneseq
        %v1736 = vshrl.u32 %v1735, 7
        %v1737 = vsub.s32 4, %v1736
        %v1738 = vrot.slane %v1720, %v1737
        %v1743 = vlaneseq
        %v1744 = vshrl.u32 %v1743, 7
        %v1745 = vsub.s32 0, %v1744
        %v1746 = vrot.slane %v1726, %v1745
        %v1747 = vlaneseq
        %v1748 = vshrl.u32 %v1747, 7
        %v1749 = vsub.s32 0, %v1748
        %v1750 = vrot.slane %v1730, %v1749
        %v1751 = vlaneseq
        %v1752 = vshrl.u32 %v1751, 7
        %v1753 = vsub.s32 0, %v1752
        %v1754 = vrot.slane %v1734, %v1753
        %v1755 = vlaneseq
        %v1756 = vshrl.u32 %v1755, 7
        %v1757 = vsub.s32 0, %v1756
        %v1758 = vrot.slane %v1738, %v1757
        %v1759 = vmul.f32 %v1469, %v1746
        %v1760 = vmul.f32 %v1471, %v1750
        %v1761 = vmul.f32 %v1635, %v1754
        %v1762 = vmul.f32 %v1637, %v1758
        %v1767 = vrot.slane %v1759, 3
        %v1768 = vrot.slane %v1760, 3
        %v1769 = vrot.slane %v1761, 3
        %v1770 = vrot.slane %v1762, 3
        %v1775 = vadd.f32 %v1707, %v1767
        %v1776 = vadd.f32 %v1708, %v1768
        %v1777 = vadd.f32 %v1709, %v1769
        %v1778 = vadd.f32 %v1710, %v1770
        %v1779 = vrot.slane %v674, 5
        %v1780 = vrot.slane %v1779, 4
        %v1781 = vrot.slane %v675, 5
        %v1782 = vrot.slane %v1781, 4
        %v1785 = vmul.f32 %v666, %v1780
        %v1786 = vmul.f32 %v667, %v1782
        %v1787 = vmul.f32 %v1785, %v1662
        %v1788 = vmul.f32 %v1786, %v1664
        %v1791 = vlaneseq
        %v1792 = vshrl.u32 %v1791, 7
        %v1793 = vsub.s32 0, %v1792
        %v1794 = vrot.slane %v1787, %v1793
        %v1795 = vlaneseq
        %v1796 = vshrl.u32 %v1795, 7
        %v1797 = vsub.s32 4, %v1796
        %v1798 = vrot.slane %v1787, %v1797
        %v1799 = vlaneseq
        %v1800 = vshrl.u32 %v1799, 7
        %v1801 = vsub.s32 0, %v1800
        %v1802 = vrot.slane %v1788, %v1801
        %v1803 = vlaneseq
        %v1804 = vshrl.u32 %v1803, 7
        %v1805 = vsub.s32 4, %v1804
        %v1806 = vrot.slane %v1788, %v1805
        %v1811 = vlaneseq
        %v1812 = vshrl.u32 %v1811, 7
        %v1813 = vsub.s32 0, %v1812
        %v1814 = vrot.slane %v1794, %v1813
        %v1815 = vlaneseq
        %v1816 = vshrl.u32 %v1815, 7
        %v1817 = vsub.s32 0, %v1816
        %v1818 = vrot.slane %v1798, %v1817
        %v1819 = vlaneseq
        %v1820 = vshrl.u32 %v1819, 7
        %v1821 = vsub.s32 0, %v1820
        %v1822 = vrot.slane %v1802, %v1821
        %v1823 = vlaneseq
        %v1824 = vshrl.u32 %v1823, 7
        %v1825 = vsub.s32 0, %v1824
        %v1826 = vrot.slane %v1806, %v1825
        %v1827 = vmul.f32 %v1469, %v1814
        %v1828 = vmul.f32 %v1471, %v1818
        %v1829 = vmul.f32 %v1635, %v1822
        %v1830 = vmul.f32 %v1637, %v1826
        %v1831 = vmul.f32 %v1475, %v1814
        %v1832 = vmul.f32 %v1477, %v1818
        %v1833 = vmul.f32 %v1641, %v1822
        %v1834 = vmul.f32 %v1643, %v1826
        %vm1843 = vcmask 1041408
        %v1844 = vrot.slane %v1827, 6
        %v1845 = vrot.slane %v1831, 6
        %v1846 = vsel %vm1843, %v1844, %v1845
        %v1847 = vrot.slane %v1828, 6
        %v1848 = vrot.slane %v1832, 6
        %v1849 = vsel %vm1843, %v1847, %v1848
        %v1850 = vrot.slane %v1829, 6
        %v1851 = vrot.slane %v1833, 6
        %v1852 = vsel %vm1843, %v1850, %v1851
        %v1853 = vrot.slane %v1830, 6
        %v1854 = vrot.slane %v1834, 6
        %v1855 = vsel %vm1843, %v1853, %v1854
        %v1860 = vadd.f32 %v1775, %v1846
        %v1861 = vadd.f32 %v1776, %v1849
        %v1862 = vadd.f32 %v1777, %v1852
        %v1863 = vadd.f32 %v1778, %v1855
        %v1864 = vmul.f32 %v1785, %v1714
        %v1865 = vmul.f32 %v1786, %v1716
        %v1868 = vlaneseq
        %v1869 = vshrl.u32 %v1868, 7
        %v1870 = vsub.s32 0, %v1869
        %v1871 = vrot.slane %v1864, %v1870
        %v1872 = vlaneseq
        %v1873 = vshrl.u32 %v1872, 7
        %v1874 = vsub.s32 4, %v1873
        %v1875 = vrot.slane %v1864, %v1874
        %v1876 = vlaneseq
        %v1877 = vshrl.u32 %v1876, 7
        %v1878 = vsub.s32 0, %v1877
        %v1879 = vrot.slane %v1865, %v1878
        %v1880 = vlaneseq
        %v1881 = vshrl.u32 %v1880, 7
        %v1882 = vsub.s32 4, %v1881
        %v1883 = vrot.slane %v1865, %v1882
        %v1888 = vlaneseq
        %v1889 = vshrl.u32 %v1888, 7
        %v1890 = vsub.s32 0, %v1889
        %v1891 = vrot.slane %v1871, %v1890
        %v1892 = vlaneseq
        %v1893 = vshrl.u32 %v1892, 7
        %v1894 = vsub.s32 0, %v1893
        %v1895 = vrot.slane %v1875, %v1894
        %v1896 = vlaneseq
        %v1897 = vshrl.u32 %v1896, 7
        %v1898 = vsub.s32 0, %v1897
        %v1899 = vrot.slane %v1879, %v1898
        %v1900 = vlaneseq
        %v1901 = vshrl.u32 %v1900, 7
        %v1902 = vsub.s32 0, %v1901
        %v1903 = vrot.slane %v1883, %v1902
        %v1904 = vmul.f32 %v1475, %v1891
        %v1905 = vmul.f32 %v1477, %v1895
        %v1906 = vmul.f32 %v1641, %v1899
        %v1907 = vmul.f32 %v1643, %v1903
        %v1912 = vrot.slane %v1904, 1
        %v1913 = vrot.slane %v1905, 1
        %v1914 = vrot.slane %v1906, 1
        %v1915 = vrot.slane %v1907, 1
        %v1920 = vadd.f32 %v1860, %v1912
        %v1921 = vadd.f32 %v1861, %v1913
        %v1922 = vadd.f32 %v1862, %v1914
        %v1923 = vadd.f32 %v1863, %v1915
        %v1924 = vmul.f32 %v674, %v1654
        %v1925 = vmul.f32 %v675, %v1656
        %v1926 = vmul.f32 %v1924, %v1662
        %v1927 = vmul.f32 %v1925, %v1664
        %v1930 = vlaneseq
        %v1931 = vshrl.u32 %v1930, 7
        %v1932 = vsub.s32 0, %v1931
        %v1933 = vrot.slane %v1926, %v1932
        %v1934 = vlaneseq
        %v1935 = vshrl.u32 %v1934, 7
        %v1936 = vsub.s32 4, %v1935
        %v1937 = vrot.slane %v1926, %v1936
        %v1938 = vlaneseq
        %v1939 = vshrl.u32 %v1938, 7
        %v1940 = vsub.s32 0, %v1939
        %v1941 = vrot.slane %v1927, %v1940
        %v1942 = vlaneseq
        %v1943 = vshrl.u32 %v1942, 7
        %v1944 = vsub.s32 4, %v1943
        %v1945 = vrot.slane %v1927, %v1944
        %v1950 = vlaneseq
        %v1951 = vshrl.u32 %v1950, 7
        %v1952 = vsub.s32 0, %v1951
        %v1953 = vrot.slane %v1933, %v1952
        %v1954 = vlaneseq
        %v1955 = vshrl.u32 %v1954, 7
        %v1956 = vsub.s32 0, %v1955
        %v1957 = vrot.slane %v1937, %v1956
        %v1958 = vlaneseq
        %v1959 = vshrl.u32 %v1958, 7
        %v1960 = vsub.s32 0, %v1959
        %v1961 = vrot.slane %v1941, %v1960
        %v1962 = vlaneseq
        %v1963 = vshrl.u32 %v1962, 7
        %v1964 = vsub.s32 0, %v1963
        %v1965 = vrot.slane %v1945, %v1964
        %v1966 = vmul.f32 %v1475, %v1953
        %v1967 = vmul.f32 %v1477, %v1957
        %v1968 = vmul.f32 %v1641, %v1961
        %v1969 = vmul.f32 %v1643, %v1965
        %v1974 = vrot.slane %v1966, 4
        %v1975 = vrot.slane %v1967, 4
        %v1976 = vrot.slane %v1968, 4
        %v1977 = vrot.slane %v1969, 4
        %v1982 = vadd.f32 %v1920, %v1974
        %v1983 = vadd.f32 %v1921, %v1975
        %v1984 = vadd.f32 %v1922, %v1976
        %v1985 = vadd.f32 %v1923, %v1977
        %v1986 = vmul.f32 %v1924, %v1714
        %v1987 = vmul.f32 %v1925, %v1716
        %v1990 = vlaneseq
        %v1991 = vshrl.u32 %v1990, 7
        %v1992 = vsub.s32 0, %v1991
        %v1993 = vrot.slane %v1986, %v1992
        %v1994 = vlaneseq
        %v1995 = vshrl.u32 %v1994, 7
        %v1996 = vsub.s32 4, %v1995
        %v1997 = vrot.slane %v1986, %v1996
        %v1998 = vlaneseq
        %v1999 = vshrl.u32 %v1998, 7
        %v2000 = vsub.s32 0, %v1999
        %v2001 = vrot.slane %v1987, %v2000
        %v2002 = vlaneseq
        %v2003 = vshrl.u32 %v2002, 7
        %v2004 = vsub.s32 4, %v2003
        %v2005 = vrot.slane %v1987, %v2004
        %v2010 = vlaneseq
        %v2011 = vshrl.u32 %v2010, 7
        %v2012 = vsub.s32 0, %v2011
        %v2013 = vrot.slane %v1993, %v2012
        %v2014 = vlaneseq
        %v2015 = vshrl.u32 %v2014, 7
        %v2016 = vsub.s32 0, %v2015
        %v2017 = vrot.slane %v1997, %v2016
        %v2018 = vlaneseq
        %v2019 = vshrl.u32 %v2018, 7
        %v2020 = vsub.s32 0, %v2019
        %v2021 = vrot.slane %v2001, %v2020
        %v2022 = vlaneseq
        %v2023 = vshrl.u32 %v2022, 7
        %v2024 = vsub.s32 0, %v2023
        %v2025 = vrot.slane %v2005, %v2024
        %v2026 = vmul.f32 %v1475, %v2013
        %v2027 = vmul.f32 %v1477, %v2017
        %v2028 = vmul.f32 %v1641, %v2021
        %v2029 = vmul.f32 %v1643, %v2025
        %v2030 = vmul.f32 %v1481, %v2013
        %v2031 = vmul.f32 %v1483, %v2017
        %v2032 = vmul.f32 %v1647, %v2021
        %v2033 = vmul.f32 %v1649, %v2025
        %vm2042 = vcmask 1040384
        %v2043 = vrot.slane %v2026, 7
        %v2044 = vrot.slane %v2030, 7
        %v2045 = vsel %vm2042, %v2043, %v2044
        %v2046 = vrot.slane %v2027, 7
        %v2047 = vrot.slane %v2031, 7
        %v2048 = vsel %vm2042, %v2046, %v2047
        %v2049 = vrot.slane %v2028, 7
        %v2050 = vrot.slane %v2032, 7
        %v2051 = vsel %vm2042, %v2049, %v2050
        %v2052 = vrot.slane %v2029, 7
        %v2053 = vrot.slane %v2033, 7
        %v2054 = vsel %vm2042, %v2052, %v2053
        %v2059 = vadd.f32 %v1982, %v2045
        %v2060 = vadd.f32 %v1983, %v2048
        %v2061 = vadd.f32 %v1984, %v2051
        %v2062 = vadd.f32 %v1985, %v2054
        %v2063 = vmul.f32 %v674, %v1780
        %v2064 = vmul.f32 %v675, %v1782
        %v2065 = vmul.f32 %v2063, %v1662
        %v2066 = vmul.f32 %v2064, %v1664
        %v2069 = vlaneseq
        %v2070 = vshrl.u32 %v2069, 7
        %v2071 = vsub.s32 0, %v2070
        %v2072 = vrot.slane %v2065, %v2071
        %v2073 = vlaneseq
        %v2074 = vshrl.u32 %v2073, 7
        %v2075 = vsub.s32 4, %v2074
        %v2076 = vrot.slane %v2065, %v2075
        %v2077 = vlaneseq
        %v2078 = vshrl.u32 %v2077, 7
        %v2079 = vsub.s32 0, %v2078
        %v2080 = vrot.slane %v2066, %v2079
        %v2081 = vlaneseq
        %v2082 = vshrl.u32 %v2081, 7
        %v2083 = vsub.s32 4, %v2082
        %v2084 = vrot.slane %v2066, %v2083
        %v2089 = vlaneseq
        %v2090 = vshrl.u32 %v2089, 7
        %v2091 = vsub.s32 0, %v2090
        %v2092 = vrot.slane %v2072, %v2091
        %v2093 = vlaneseq
        %v2094 = vshrl.u32 %v2093, 7
        %v2095 = vsub.s32 0, %v2094
        %v2096 = vrot.slane %v2076, %v2095
        %v2097 = vlaneseq
        %v2098 = vshrl.u32 %v2097, 7
        %v2099 = vsub.s32 0, %v2098
        %v2100 = vrot.slane %v2080, %v2099
        %v2101 = vlaneseq
        %v2102 = vshrl.u32 %v2101, 7
        %v2103 = vsub.s32 0, %v2102
        %v2104 = vrot.slane %v2084, %v2103
        %v2105 = vmul.f32 %v1481, %v2092
        %v2106 = vmul.f32 %v1483, %v2096
        %v2107 = vmul.f32 %v1647, %v2100
        %v2108 = vmul.f32 %v1649, %v2104
        %v2113 = vrot.slane %v2105, 2
        %v2114 = vrot.slane %v2106, 2
        %v2115 = vrot.slane %v2107, 2
        %v2116 = vrot.slane %v2108, 2
        %v2121 = vadd.f32 %v2059, %v2113
        %v2122 = vadd.f32 %v2060, %v2114
        %v2123 = vadd.f32 %v2061, %v2115
        %v2124 = vadd.f32 %v2062, %v2116
        %v2125 = vmul.f32 %v2063, %v1714
        %v2126 = vmul.f32 %v2064, %v1716
        %v2129 = vlaneseq
        %v2130 = vshrl.u32 %v2129, 7
        %v2131 = vsub.s32 0, %v2130
        %v2132 = vrot.slane %v2125, %v2131
        %v2133 = vlaneseq
        %v2134 = vshrl.u32 %v2133, 7
        %v2135 = vsub.s32 4, %v2134
        %v2136 = vrot.slane %v2125, %v2135
        %v2137 = vlaneseq
        %v2138 = vshrl.u32 %v2137, 7
        %v2139 = vsub.s32 0, %v2138
        %v2140 = vrot.slane %v2126, %v2139
        %v2141 = vlaneseq
        %v2142 = vshrl.u32 %v2141, 7
        %v2143 = vsub.s32 4, %v2142
        %v2144 = vrot.slane %v2126, %v2143
        %v2149 = vlaneseq
        %v2150 = vshrl.u32 %v2149, 7
        %v2151 = vsub.s32 0, %v2150
        %v2152 = vrot.slane %v2132, %v2151
        %v2153 = vlaneseq
        %v2154 = vshrl.u32 %v2153, 7
        %v2155 = vsub.s32 0, %v2154
        %v2156 = vrot.slane %v2136, %v2155
        %v2157 = vlaneseq
        %v2158 = vshrl.u32 %v2157, 7
        %v2159 = vsub.s32 0, %v2158
        %v2160 = vrot.slane %v2140, %v2159
        %v2161 = vlaneseq
        %v2162 = vshrl.u32 %v2161, 7
        %v2163 = vsub.s32 0, %v2162
        %v2164 = vrot.slane %v2144, %v2163
        %v2165 = vmul.f32 %v1481, %v2152
        %v2166 = vmul.f32 %v1483, %v2156
        %v2167 = vmul.f32 %v1647, %v2160
        %v2168 = vmul.f32 %v1649, %v2164
        %v2173 = vrot.slane %v2165, 5
        %v2174 = vrot.slane %v2166, 5
        %v2175 = vrot.slane %v2167, 5
        %v2176 = vrot.slane %v2168, 5
        %v2181 = vadd.f32 %v2121, %v2173
        %v2182 = vadd.f32 %v2122, %v2174
        %v2183 = vadd.f32 %v2123, %v2175
        %v2184 = vadd.f32 %v2124, %v2176
        %v2189 = vcombine.low %v2181, %v2182
        %v2190 = vcombine.low %v2183, %v2184
        %v2193 = vadd.f32 %v646, %v2189
        %v2194 = vadd.f32 %v647, %v2190
        %2195 = vst [vmem:[#allocation2] sm:$0x77] %v2193
        %2196 = vst [vmem:[#allocation2 + $0x8] sm:$0x77] %v2194
      $region33: #{vector_int.1} parent=27 // loop_footer
        %s155 = sadd.s32 1, %s151
      $region34: #{vector_int.1} parent=27 // loop_footer_branch
        %150 = sbr.rel target = $region30
      $region35: #{vector_int.1} parent=27 // loop_exit
        _
      %v2197 = vld [vmem:[#allocation2] sm:$0x77]
      %v2198 = vld [vmem:[#allocation2 + $0x8] sm:$0x77]
      %2199 = vst [vmem:[%s143] sm:$0x77] %v2197
      %2200 = vst [vmem:[%s143 + $0x8] sm:$0x77] %v2198
      %p2201 = scmp.lt.s32.totalorder %s13, 1
      %s2202 = scalar_select %p2201, %s13, 1
      %s2203 = smul.addr %s2202, 4
      %s2204 = smul.addr %s2203, 4
      %s2205 = scalar_lea.vmem %s2, %s2204
      // Predicated region
      $region36: #{vector_int.1} parent=27 // pred_check
        %p2206 = pneg %p78
      $region37: #{vector_int.1} parent=27 // pred_check_branch
        %2208 = sbr.rel (%p2206) target = $region39
      $region38: #{vector_int.1} parent=27 // pred_region
        _
      $region39: #{vector_int.1} parent=27 // pred_fallthru
        _
    $region28: #{vector_int.1} parent=5 // pred_fallthru
      _
    %p2209 = scmp.le.s32.totalorder 2, %s8
    // Predicated region
    $region40: #{vector_int.1} parent=5 // pred_check
      %p2210 = pneg %p2209
    $region41: #{vector_int.1} parent=5 // pred_check_branch
      %2212 = sbr.rel (%p2210) target = $region43
    $region42: #{vector_int.1} parent=5 // pred_region
      %s2213 = ssub.s32 %s8, 2
      // Predicated region
      $region44: #{vector_int.1} parent=42 // pred_check
        %p2214 = pneg %p84
      $region45: #{vector_int.1} parent=42 // pred_check_branch
        %2216 = sbr.rel (%p2214) target = $region47
      $region46: #{vector_int.1} parent=42 // pred_region
        %p2217 = scmp.lt.s32.totalorder %s14, 1
        %s2218 = scalar_select %p2217, %s14, 1
        %s2219 = smul.addr %s2218, 4
        %s2220 = smul.addr %s2219, 4
        %s2221 = scalar_lea.vmem %s2, %s2220
      $region47: #{vector_int.1} parent=42 // pred_fallthru
        _
    $region43: #{vector_int.1} parent=5 // pred_fallthru
      _
  $region6: #{vector_int.1} parent=0 // loop_footer
    %s12 = sadd.s32 1, %s8
  $region7: #{vector_int.1} parent=0 // loop_footer_branch
    %7 = sbr.rel target = $region3
  $region8: #{vector_int.1} parent=0 // loop_exit
    _

</llo_original>
